<compile_context>
chip_gen: v5e
topology: v5e:2x2
jax: 0.10.0
libtpu: 0.0.40
codegen_flags: <defaults>
</compile_context>

<pallas_src>
import jax
import jax.numpy as jnp
from jax import lax
from jax.experimental import pallas as pl
from jax.experimental.pallas import tpu as pltpu

LN_EPS = 1e-5  # torch.nn.LayerNorm default


def _proj_head_kernel(x_ref, w1_ref, b1_ref, w2_ref, b2_ref, g_ref, beta_ref,
                      o_ref):
    # ---- Linear 1: bf16 MXU inputs, f32 accumulation; bias + ReLU in f32 ----
    h = jnp.dot(x_ref[...], w1_ref[...], preferred_element_type=jnp.float32)
    h = jnp.maximum(h + b1_ref[...], 0.0)

    # ---- Linear 2: cast activations to bf16 for the MXU, accumulate f32 ----
    y = jnp.dot(h.astype(jnp.bfloat16), w2_ref[...],
                preferred_element_type=jnp.float32) + b2_ref[...]

    # ---- LayerNorm over last dim (projection_dim), f32, single-pass stats ----
    mean = jnp.mean(y, axis=-1, keepdims=True)
    mean_sq = jnp.mean(y * y, axis=-1, keepdims=True)
    var = mean_sq - mean * mean
    scale = g_ref[...] * lax.rsqrt(var + LN_EPS)   # fold gamma into the scale
    shift = beta_ref[...] - mean * scale
    o_ref[...] = (y * scale + shift).astype(o_ref.dtype)


def _build_call(B_pad, E, H, P, block_b, single_buffer_weights,
                vmem_limit_bytes):
    """Construct the pallas_call for the given tiling."""
    def weight_spec(shape):
        idx = lambda i: tuple(0 for _ in shape)
        if single_buffer_weights:
            # Grid-invariant -> no need to double-buffer; halves weight VMEM.
            return pl.BlockSpec(shape, idx, pipeline_mode=pl.Buffered(1))
        return pl.BlockSpec(shape, idx)

    grid = (B_pad // block_b,)
    return pl.pallas_call(
        _proj_head_kernel,
        out_shape=jax.ShapeDtypeStruct((B_pad, P), jnp.float32),
        grid_spec=pltpu.PrefetchScalarGridSpec(
            num_scalar_prefetch=0,
            grid=grid,
            in_specs=[
                pl.BlockSpec((block_b, E), lambda i: (i, 0)),  # x tile (pipelined)
                weight_spec((E, H)),                           # W1 (resident)
                pl.BlockSpec((1, H), lambda i: (0, 0)),        # b1
                weight_spec((H, P)),                           # W2 (resident)
                pl.BlockSpec((1, P), lambda i: (0, 0)),        # b2
                pl.BlockSpec((1, P), lambda i: (0, 0)),        # gamma
                pl.BlockSpec((1, P), lambda i: (0, 0)),        # beta
            ],
            out_specs=pl.BlockSpec((block_b, P), lambda i: (i, 0)),
        ),
        compiler_params=pltpu.CompilerParams(
            dimension_semantics=("parallel",),
            vmem_limit_bytes=vmem_limit_bytes),
    )


def projection_head_relu(x, w1, b1, w2, b2, gamma, beta, *, block_b=None):
    """x: (B, E) float32. w1: (E, H), w2: (H, P). Returns (B, P) float32."""
    B, E = x.shape
    H = w1.shape[1]
    P = w2.shape[1]

    # Batch tile: cap at 512 rows, aim for >=2 grid steps (pipelining +
    # v7x dual-TC sharding), sublane-aligned (multiple of 8).
    if block_b is None:
        block_b = min(512, max(8, pl.cdiv(B, 2)))
    block_b = pl.cdiv(block_b, 8) * 8

    # Pad B so every tile is full (no partial-tile assert).
    B_pad = pl.cdiv(B, block_b) * block_b
    if B_pad != B:
        x = jnp.pad(x, ((0, B_pad - B), (0, 0)))

    # MXU operands in bf16 (halves weight DMA + VMEM); elementwise path in f32.
    x_bf = x.astype(jnp.bfloat16)
    w1_bf = w1.astype(jnp.bfloat16)
    w2_bf = w2.astype(jnp.bfloat16)
    b1 = b1.astype(jnp.float32).reshape(1, H)
    b2 = b2.astype(jnp.float32).reshape(1, P)
    gamma = gamma.astype(jnp.float32).reshape(1, P)
    beta = beta.astype(jnp.float32).reshape(1, P)

    # Explicit VMEM budget (clamped to v7x's 64 MiB physical ceiling).
    est = (2 * block_b * E * 2            # x tile, double-buffered, bf16
           + 2 * block_b * P * 4          # out tile, double-buffered, f32
           + (E * H + H * P) * 2          # W1/W2, single-buffered, bf16
           + 2 * (H + 3 * P) * 4)         # biases / gamma / beta
    vmem_limit = int(min(64 * 2**20, max(32 * 2**20, 2 * est)))

    args = (x_bf, w1_bf, b1, w2_bf, b2, gamma, beta)
    try:
        out = _build_call(B_pad, E, H, P, block_b, True, vmem_limit)(*args)
    except Exception:
        # Fallback for JAX versions without BlockSpec pipeline_mode / Buffered(1).
        out = _build_call(B_pad, E, H, P, block_b, False, vmem_limit)(*args)

    return out[:B] if B_pad != B else out


def _reference(x, w1, b1, w2, b2, gamma, beta):
    h = jnp.maximum(x @ w1 + b1, 0.0)
    y = h @ w2 + b2
    mean = jnp.mean(y, axis=-1, keepdims=True)
    var = jnp.mean((y - mean) ** 2, axis=-1, keepdims=True)
    return (y - mean) / jnp.sqrt(var + LN_EPS) * gamma + beta


if __name__ == "__main__":
    # Small but lane-dense shapes (H, P multiples of 128), consistent with
    # ProjectionHead_Relu(embedding_dim=128, hidden_dim=256, projection_dim=128).
    B, E, H, P = 16, 128, 256, 128

    key = jax.random.PRNGKey(0)
    kx, k1, k2, k3, k4 = jax.random.split(key, 5)

    x = jax.random.normal(kx, (B, E), dtype=jnp.float32)

    # Deterministic synthetic parameters (uniform, torch-Linear-like scaling).
    w1 = jax.random.uniform(k1, (E, H), jnp.float32, -1.0, 1.0) / jnp.sqrt(E)
    b1 = jax.random.uniform(k2, (1, H), jnp.float32, -1.0, 1.0) / jnp.sqrt(E)
    w2 = jax.random.uniform(k3, (H, P), jnp.float32, -1.0, 1.0) / jnp.sqrt(H)
    b2 = jax.random.uniform(k4, (1, P), jnp.float32, -1.0, 1.0) / jnp.sqrt(H)
    gamma = jnp.ones((1, P), jnp.float32)   # LayerNorm weight init
    beta = jnp.zeros((1, P), jnp.float32)   # LayerNorm bias init

    out = projection_head_relu(x, w1, b1, w2, b2, gamma, beta)
    out = jax.block_until_ready(out)

    ref = _reference(x, w1, b1, w2, b2, gamma, beta)
    assert out.shape == (B, P)
    # bf16 MXU inputs: post-LayerNorm output is O(1); allow bf16-level error.
    max_err = float(jnp.max(jnp.abs(out - ref)))
    assert jnp.allclose(out, ref, atol=5e-2, rtol=0.0), max_err

    print("KERNEL_OK")
</pallas_src>

<mosaic_0001>
module attributes {stable_mosaic.version = 11 : i64} {
  func.func @_proj_head_kernel(%arg0: i32, %arg1: memref<8x128xbf16, #tpu.memory_space<vmem>>, %arg2: memref<128x256xbf16, #tpu.memory_space<vmem>>, %arg3: memref<1x256xf32, #tpu.memory_space<vmem>>, %arg4: memref<256x128xbf16, #tpu.memory_space<vmem>>, %arg5: memref<1x128xf32, #tpu.memory_space<vmem>>, %arg6: memref<1x128xf32, #tpu.memory_space<vmem>>, %arg7: memref<1x128xf32, #tpu.memory_space<vmem>>, %arg8: memref<8x128xf32, #tpu.memory_space<vmem>>) attributes {dimension_semantics = [#tpu.dimension_semantics<parallel>], iteration_bounds = array<i64: 2>, scalar_prefetch = 0 : i64, scratch_operands = 0 : i64, tpu.core_type = #tpu.core_type<tc>, window_params = [{transform_indices = @transform_0, window_bounds = array<i64: 8, 128>}, {pipeline_mode = #tpu.pipeline_mode<synchronous>, transform_indices = @transform_1, window_bounds = array<i64: 128, 256>}, {pipeline_mode = #tpu.pipeline_mode<synchronous>, transform_indices = @transform_2, window_bounds = array<i64: 1, 256>}, {pipeline_mode = #tpu.pipeline_mode<synchronous>, transform_indices = @transform_3, window_bounds = array<i64: 256, 128>}, {pipeline_mode = #tpu.pipeline_mode<synchronous>, transform_indices = @transform_4, window_bounds = array<i64: 1, 128>}, {pipeline_mode = #tpu.pipeline_mode<synchronous>, transform_indices = @transform_5, window_bounds = array<i64: 1, 128>}, {pipeline_mode = #tpu.pipeline_mode<synchronous>, transform_indices = @transform_6, window_bounds = array<i64: 1, 128>}, {transform_indices = @transform_7, window_bounds = array<i64: 8, 128>}]} {
    %c0 = arith.constant 0 : index
    %c0_0 = arith.constant 0 : index
    %0 = vector.load %arg1[%c0, %c0_0] : memref<8x128xbf16, #tpu.memory_space<vmem>>, vector<8x128xbf16>
    %c0_1 = arith.constant 0 : index
    %c0_2 = arith.constant 0 : index
    %1 = vector.load %arg2[%c0_1, %c0_2] : memref<128x256xbf16, #tpu.memory_space<vmem>>, vector<128x256xbf16>
    %cst = arith.constant dense<0.000000e+00> : vector<8x256xf32>
    %2 = tpu.matmul %0, %1, %cst {dimension_numbers = #tpu.dot_dimension_numbers<[1], [0], [0], [1], [0, 0, 1, 1], [], []>} : vector<8x128xbf16>, vector<128x256xbf16>, vector<8x256xf32> -> vector<8x256xf32>
    %c0_3 = arith.constant 0 : index
    %c0_4 = arith.constant 0 : index
    %3 = vector.load %arg3[%c0_3, %c0_4] : memref<1x256xf32, #tpu.memory_space<vmem>>, vector<1x256xf32>
    %4 = vector.broadcast %3 : vector<1x256xf32> to vector<8x256xf32>
    %5 = arith.addf %2, %4 : vector<8x256xf32>
    %cst_5 = arith.constant 0.000000e+00 : f32
    %6 = vector.broadcast %cst_5 : f32 to vector<8x256xf32>
    %7 = arith.maximumf %5, %6 : vector<8x256xf32>
    %8 = arith.truncf %7 : vector<8x256xf32> to vector<8x256xbf16>
    %c0_6 = arith.constant 0 : index
    %c0_7 = arith.constant 0 : index
    %9 = vector.load %arg4[%c0_6, %c0_7] : memref<256x128xbf16, #tpu.memory_space<vmem>>, vector<256x128xbf16>
    %cst_8 = arith.constant dense<0.000000e+00> : vector<8x128xf32>
    %10 = tpu.matmul %8, %9, %cst_8 {dimension_numbers = #tpu.dot_dimension_numbers<[1], [0], [0], [1], [0, 0, 1, 1], [], []>} : vector<8x256xbf16>, vector<256x128xbf16>, vector<8x128xf32> -> vector<8x128xf32>
    %c0_9 = arith.constant 0 : index
    %c0_10 = arith.constant 0 : index
    %11 = vector.load %arg5[%c0_9, %c0_10] : memref<1x128xf32, #tpu.memory_space<vmem>>, vector<1x128xf32>
    %12 = vector.broadcast %11 : vector<1x128xf32> to vector<8x128xf32>
    %13 = arith.addf %10, %12 : vector<8x128xf32>
    %cst_11 = arith.constant dense<0.000000e+00> : vector<8xf32>
    %14 = vector.multi_reduction <add>, %13, %cst_11 [1] : vector<8x128xf32> to vector<8xf32>
    %15 = vector.shape_cast %14 : vector<8xf32> to vector<8x1xf32>
    %cst_12 = arith.constant 1.280000e+02 : f32
    %16 = vector.broadcast %cst_12 : f32 to vector<8x1xf32>
    %17 = arith.divf %15, %16 : vector<8x1xf32>
    %18 = arith.mulf %13, %13 : vector<8x128xf32>
    %cst_13 = arith.constant dense<0.000000e+00> : vector<8xf32>
    %19 = vector.multi_reduction <add>, %18, %cst_13 [1] : vector<8x128xf32> to vector<8xf32>
    %20 = vector.shape_cast %19 : vector<8xf32> to vector<8x1xf32>
    %cst_14 = arith.constant 1.280000e+02 : f32
    %21 = vector.broadcast %cst_14 : f32 to vector<8x1xf32>
    %22 = arith.divf %20, %21 : vector<8x1xf32>
    %23 = arith.mulf %17, %17 : vector<8x1xf32>
    %24 = arith.subf %22, %23 : vector<8x1xf32>
    %c0_15 = arith.constant 0 : index
    %c0_16 = arith.constant 0 : index
    %25 = vector.load %arg6[%c0_15, %c0_16] : memref<1x128xf32, #tpu.memory_space<vmem>>, vector<1x128xf32>
    %cst_17 = arith.constant 9.99999974E-6 : f32
    %26 = vector.broadcast %cst_17 : f32 to vector<8x1xf32>
    %27 = arith.addf %24, %26 : vector<8x1xf32>
    %28 = math.rsqrt %27 : vector<8x1xf32>
    %29 = vector.broadcast %25 : vector<1x128xf32> to vector<8x128xf32>
    %30 = vector.broadcast %28 : vector<8x1xf32> to vector<8x128xf32>
    %31 = arith.mulf %29, %30 : vector<8x128xf32>
    %c0_18 = arith.constant 0 : index
    %c0_19 = arith.constant 0 : index
    %32 = vector.load %arg7[%c0_18, %c0_19] : memref<1x128xf32, #tpu.memory_space<vmem>>, vector<1x128xf32>
    %33 = vector.broadcast %17 : vector<8x1xf32> to vector<8x128xf32>
    %34 = arith.mulf %33, %31 : vector<8x128xf32>
    %35 = vector.broadcast %32 : vector<1x128xf32> to vector<8x128xf32>
    %36 = arith.subf %35, %34 : vector<8x128xf32>
    %37 = arith.mulf %13, %31 : vector<8x128xf32>
    %38 = arith.addf %37, %36 : vector<8x128xf32>
    %c0_20 = arith.constant 0 : index
    %c0_21 = arith.constant 0 : index
    %39 = vector.load %arg8[%c0_20, %c0_21] : memref<8x128xf32, #tpu.memory_space<vmem>>, vector<8x128xf32>
    tpu.vector_store %arg8[%c0_20, %c0_21], %38 {strides = array<i32>} : memref<8x128xf32, #tpu.memory_space<vmem>>, vector<8x128xf32>,
    return
  }
  func.func @transform_0(%arg0: i32) -> (i32, i32) {
    %c0_i32 = arith.constant 0 : i32
    %c0_i32_0 = arith.constant 0 : i32
    return %arg0, %c0_i32 : i32, i32
  }
  func.func @transform_1(%arg0: i32) -> (i32, i32) {
    %c0_i32 = arith.constant 0 : i32
    %c0_i32_0 = arith.constant 0 : i32
    %c0_i32_1 = arith.constant 0 : i32
    return %c0_i32, %c0_i32_0 : i32, i32
  }
  func.func @transform_2(%arg0: i32) -> (i32, i32) {
    %c0_i32 = arith.constant 0 : i32
    %c0_i32_0 = arith.constant 0 : i32
    %c0_i32_1 = arith.constant 0 : i32
    return %c0_i32, %c0_i32_0 : i32, i32
  }
  func.func @transform_3(%arg0: i32) -> (i32, i32) {
    %c0_i32 = arith.constant 0 : i32
    %c0_i32_0 = arith.constant 0 : i32
    %c0_i32_1 = arith.constant 0 : i32
    return %c0_i32, %c0_i32_0 : i32, i32
  }
  func.func @transform_4(%arg0: i32) -> (i32, i32) {
    %c0_i32 = arith.constant 0 : i32
    %c0_i32_0 = arith.constant 0 : i32
    %c0_i32_1 = arith.constant 0 : i32
    return %c0_i32, %c0_i32_0 : i32, i32
  }
  func.func @transform_5(%arg0: i32) -> (i32, i32) {
    %c0_i32 = arith.constant 0 : i32
    %c0_i32_0 = arith.constant 0 : i32
    %c0_i32_1 = arith.constant 0 : i32
    return %c0_i32, %c0_i32_0 : i32, i32
  }
  func.func @transform_6(%arg0: i32) -> (i32, i32) {
    %c0_i32 = arith.constant 0 : i32
    %c0_i32_0 = arith.constant 0 : i32
    %c0_i32_1 = arith.constant 0 : i32
    return %c0_i32, %c0_i32_0 : i32, i32
  }
  func.func @transform_7(%arg0: i32) -> (i32, i32) {
    %c0_i32 = arith.constant 0 : i32
    %c0_i32_0 = arith.constant 0 : i32
    return %arg0, %c0_i32 : i32, i32
  }
}

module attributes {stable_mosaic.version = 11 : i64} {
  func.func @_proj_head_kernel(%arg0: i32, %arg1: memref<8x128xbf16, #tpu.memory_space<vmem>>, %arg2: memref<128x256xbf16, #tpu.memory_space<vmem>>, %arg3: memref<1x256xf32, #tpu.memory_space<vmem>>, %arg4: memref<256x128xbf16, #tpu.memory_space<vmem>>, %arg5: memref<1x128xf32, #tpu.memory_space<vmem>>, %arg6: memref<1x128xf32, #tpu.memory_space<vmem>>, %arg7: memref<1x128xf32, #tpu.memory_space<vmem>>, %arg8: memref<8x128xf32, #tpu.memory_space<vmem>>) attributes {dimension_semantics = [#tpu.dimension_semantics<parallel>], iteration_bounds = array<i64: 2>, scalar_prefetch = 0 : i64, scratch_operands = 0 : i64, tpu.core_type = #tpu.core_type<tc>, window_params = [{transform_indices = @transform_0, window_bounds = array<i64: 8, 128>}, {pipeline_mode = #tpu.pipeline_mode<synchronous>, transform_indices = @transform_1, window_bounds = array<i64: 128, 256>}, {pipeline_mode = #tpu.pipeline_mode<synchronous>, transform_indices = @transform_2, window_bounds = array<i64: 1, 256>}, {pipeline_mode = #tpu.pipeline_mode<synchronous>, transform_indices = @transform_3, window_bounds = array<i64: 256, 128>}, {pipeline_mode = #tpu.pipeline_mode<synchronous>, transform_indices = @transform_4, window_bounds = array<i64: 1, 128>}, {pipeline_mode = #tpu.pipeline_mode<synchronous>, transform_indices = @transform_5, window_bounds = array<i64: 1, 128>}, {pipeline_mode = #tpu.pipeline_mode<synchronous>, transform_indices = @transform_6, window_bounds = array<i64: 1, 128>}, {transform_indices = @transform_7, window_bounds = array<i64: 8, 128>}]} {
    %c0 = arith.constant 0 : index
    %c0_0 = arith.constant 0 : index
    %0 = vector.load %arg1[%c0, %c0_0] : memref<8x128xbf16, #tpu.memory_space<vmem>>, vector<8x128xbf16>
    %c0_1 = arith.constant 0 : index
    %c0_2 = arith.constant 0 : index
    %1 = vector.load %arg2[%c0_1, %c0_2] : memref<128x256xbf16, #tpu.memory_space<vmem>>, vector<128x256xbf16>
    %cst = arith.constant dense<0.000000e+00> : vector<8x256xf32>
    %2 = tpu.matmul %0, %1, %cst {dimension_numbers = #tpu.dot_dimension_numbers<[1], [0], [0], [1], [0, 0, 1, 1], [], []>} : vector<8x128xbf16>, vector<128x256xbf16>, vector<8x256xf32> -> vector<8x256xf32>
    %c0_3 = arith.constant 0 : index
    %c0_4 = arith.constant 0 : index
    %3 = vector.load %arg3[%c0_3, %c0_4] : memref<1x256xf32, #tpu.memory_space<vmem>>, vector<1x256xf32>
    %4 = vector.broadcast %3 : vector<1x256xf32> to vector<8x256xf32>
    %5 = arith.addf %2, %4 : vector<8x256xf32>
    %cst_5 = arith.constant 0.000000e+00 : f32
    %6 = vector.broadcast %cst_5 : f32 to vector<8x256xf32>
    %7 = arith.maximumf %5, %6 : vector<8x256xf32>
    %8 = arith.truncf %7 : vector<8x256xf32> to vector<8x256xbf16>
    %c0_6 = arith.constant 0 : index
    %c0_7 = arith.constant 0 : index
    %9 = vector.load %arg4[%c0_6, %c0_7] : memref<256x128xbf16, #tpu.memory_space<vmem>>, vector<256x128xbf16>
    %cst_8 = arith.constant dense<0.000000e+00> : vector<8x128xf32>
    %10 = tpu.matmul %8, %9, %cst_8 {dimension_numbers = #tpu.dot_dimension_numbers<[1], [0], [0], [1], [0, 0, 1, 1], [], []>} : vector<8x256xbf16>, vector<256x128xbf16>, vector<8x128xf32> -> vector<8x128xf32>
    %c0_9 = arith.constant 0 : index
    %c0_10 = arith.constant 0 : index
    %11 = vector.load %arg5[%c0_9, %c0_10] : memref<1x128xf32, #tpu.memory_space<vmem>>, vector<1x128xf32>
    %12 = vector.broadcast %11 : vector<1x128xf32> to vector<8x128xf32>
    %13 = arith.addf %10, %12 : vector<8x128xf32>
    %cst_11 = arith.constant dense<0.000000e+00> : vector<8xf32>
    %14 = vector.multi_reduction <add>, %13, %cst_11 [1] : vector<8x128xf32> to vector<8xf32>
    %15 = vector.shape_cast %14 : vector<8xf32> to vector<8x1xf32>
    %cst_12 = arith.constant 1.280000e+02 : f32
    %16 = vector.broadcast %cst_12 : f32 to vector<8x1xf32>
    %17 = arith.divf %15, %16 : vector<8x1xf32>
    %18 = arith.mulf %13, %13 : vector<8x128xf32>
    %cst_13 = arith.constant dense<0.000000e+00> : vector<8xf32>
    %19 = vector.multi_reduction <add>, %18, %cst_13 [1] : vector<8x128xf32> to vector<8xf32>
    %20 = vector.shape_cast %19 : vector<8xf32> to vector<8x1xf32>
    %cst_14 = arith.constant 1.280000e+02 : f32
    %21 = vector.broadcast %cst_14 : f32 to vector<8x1xf32>
    %22 = arith.divf %20, %21 : vector<8x1xf32>
    %23 = arith.mulf %17, %17 : vector<8x1xf32>
    %24 = arith.subf %22, %23 : vector<8x1xf32>
    %c0_15 = arith.constant 0 : index
    %c0_16 = arith.constant 0 : index
    %25 = vector.load %arg6[%c0_15, %c0_16] : memref<1x128xf32, #tpu.memory_space<vmem>>, vector<1x128xf32>
    %cst_17 = arith.constant 9.99999974E-6 : f32
    %26 = vector.broadcast %cst_17 : f32 to vector<8x1xf32>
    %27 = arith.addf %24, %26 : vector<8x1xf32>
    %28 = math.rsqrt %27 : vector<8x1xf32>
    %29 = vector.broadcast %25 : vector<1x128xf32> to vector<8x128xf32>
    %30 = vector.broadcast %28 : vector<8x1xf32> to vector<8x128xf32>
    %31 = arith.mulf %29, %30 : vector<8x128xf32>
    %c0_18 = arith.constant 0 : index
    %c0_19 = arith.constant 0 : index
    %32 = vector.load %arg7[%c0_18, %c0_19] : memref<1x128xf32, #tpu.memory_space<vmem>>, vector<1x128xf32>
    %33 = vector.broadcast %17 : vector<8x1xf32> to vector<8x128xf32>
    %34 = arith.mulf %33, %31 : vector<8x128xf32>
    %35 = vector.broadcast %32 : vector<1x128xf32> to vector<8x128xf32>
    %36 = arith.subf %35, %34 : vector<8x128xf32>
    %37 = arith.mulf %13, %31 : vector<8x128xf32>
    %38 = arith.addf %37, %36 : vector<8x128xf32>
    %c0_20 = arith.constant 0 : index
    %c0_21 = arith.constant 0 : index
    %39 = vector.load %arg8[%c0_20, %c0_21] : memref<8x128xf32, #tpu.memory_space<vmem>>, vector<8x128xf32>
    tpu.vector_store %arg8[%c0_20, %c0_21], %38 {strides = array<i32>} : memref<8x128xf32, #tpu.memory_space<vmem>>, vector<8x128xf32>,
    return
  }
  func.func @transform_0(%arg0: i32) -> (i32, i32) {
    %c0_i32 = arith.constant 0 : i32
    %c0_i32_0 = arith.constant 0 : i32
    return %arg0, %c0_i32 : i32, i32
  }
  func.func @transform_1(%arg0: i32) -> (i32, i32) {
    %c0_i32 = arith.constant 0 : i32
    %c0_i32_0 = arith.constant 0 : i32
    %c0_i32_1 = arith.constant 0 : i32
    return %c0_i32, %c0_i32_0 : i32, i32
  }
  func.func @transform_2(%arg0: i32) -> (i32, i32) {
    %c0_i32 = arith.constant 0 : i32
    %c0_i32_0 = arith.constant 0 : i32
    %c0_i32_1 = arith.constant 0 : i32
    return %c0_i32, %c0_i32_0 : i32, i32
  }
  func.func @transform_3(%arg0: i32) -> (i32, i32) {
    %c0_i32 = arith.constant 0 : i32
    %c0_i32_0 = arith.constant 0 : i32
    %c0_i32_1 = arith.constant 0 : i32
    return %c0_i32, %c0_i32_0 : i32, i32
  }
  func.func @transform_4(%arg0: i32) -> (i32, i32) {
    %c0_i32 = arith.constant 0 : i32
    %c0_i32_0 = arith.constant 0 : i32
    %c0_i32_1 = arith.constant 0 : i32
    return %c0_i32, %c0_i32_0 : i32, i32
  }
  func.func @transform_5(%arg0: i32) -> (i32, i32) {
    %c0_i32 = arith.constant 0 : i32
    %c0_i32_0 = arith.constant 0 : i32
    %c0_i32_1 = arith.constant 0 : i32
    return %c0_i32, %c0_i32_0 : i32, i32
  }
  func.func @transform_6(%arg0: i32) -> (i32, i32) {
    %c0_i32 = arith.constant 0 : i32
    %c0_i32_0 = arith.constant 0 : i32
    %c0_i32_1 = arith.constant 0 : i32
    return %c0_i32, %c0_i32_0 : i32, i32
  }
  func.func @transform_7(%arg0: i32) -> (i32, i32) {
    %c0_i32 = arith.constant 0 : i32
    %c0_i32_0 = arith.constant 0 : i32
    return %arg0, %c0_i32 : i32, i32
  }
}

</mosaic_0001>

<llo_original>
// kernel: tpu_custom_call.1
$region0: #{tpu_custom_call.1}
  #allocation0 [shape = 'u32[]', space=smem, size = 0x4, offset = 0x4, fixed_abs, tag = 'smem constant byte address 0x4 - core index']
  #allocation1 [shape = 'u32[72,128]{1,0:T(1,128)}', space=vmem, size = 0x9000, scoped, tag = 'internal scratch']
  %s0 = inlined_call_operand.hbm [shape: bf16[16,128], index: 0, kind: input, shape index: {}]
  %s1 = inlined_call_operand.hbm [shape: bf16[128,256], index: 1, kind: input, shape index: {}]
  %s2 = inlined_call_operand.hbm [shape: f32[1,256], index: 2, kind: input, shape index: {}]
  %s3 = inlined_call_operand.hbm [shape: bf16[256,128], index: 3, kind: input, shape index: {}]
  %s4 = inlined_call_operand.vmem [shape: f32[1,128], index: 4, kind: input, shape index: {}]
  %s5 = inlined_call_operand.vmem [shape: f32[1,128], index: 5, kind: input, shape index: {}]
  %s6 = inlined_call_operand.vmem [shape: f32[1,128], index: 6, kind: input, shape index: {}]
  %s7 = inlined_call_operand.hbm [shape: f32[16,128], index: 7, kind: output, shape index: {}]
  %s8 = sld [smem:[#allocation0]]
  $region77: #{tpu_custom_call.1} parent=0
    _
  %s10 = ssub.s32 1, %s8
  %s11 = scalar_select 0, %s10, %s8
  $region1: #{tpu_custom_call.1} parent=0
    #allocation2 [shape = 'u8[4096]{0}', space=vmem, size = 0x1000, scoped, tag = 'input window, operand 0']
    #allocation3 [shape = 's32[2]{0}', space=sflag, size = 0x8, scoped, tag = 'scoped memory for tpu_custom_call.1']
    #allocation4 [shape = 's32[2]{0}', space=sflag, size = 0x8, scoped, tag = 'scoped memory for tpu_custom_call.1']
    #allocation5 [shape = 'u8[65536]{0}', space=vmem, size = 0x10000, scoped, tag = 'input window, operand 1, single buffered']
    #allocation6 [shape = 's32[1]{0}', space=sflag, size = 0x4, scoped, tag = 'scoped memory for tpu_custom_call.1']
    #allocation7 [shape = 'u8[1024]{0}', space=vmem, size = 0x400, scoped, tag = 'input window, operand 2, single buffered']
    #allocation8 [shape = 'u8[65536]{0}', space=vmem, size = 0x10000, scoped, tag = 'input window, operand 3, single buffered']
    #allocation9 [shape = 's32[1]{0}', space=sflag, size = 0x4, scoped, tag = 'scoped memory for tpu_custom_call.1']
    #allocation10 [shape = 'u8[8192]{0}', space=vmem, size = 0x2000, scoped, tag = 'output window, operand 0']
    %12 = vsyncpa [#allocation3], 0
    %s13 = scalar_lea.sflag [#allocation3], 1
    %14 = vsyncpa %s13, 0
    %15 = vsyncpa [#allocation6], 0
    %16 = vsyncpa [#allocation9], 0
    %17 = vsyncpa [#allocation4], 0
    %s18 = scalar_lea.sflag [#allocation4], 1
    %19 = vsyncpa %s18, 0
    loop: start=0, step=1, limit=4
    $region2: #{tpu_custom_call.1} parent=1 // loop_pre_header
      _
    $region3: #{tpu_custom_call.1} parent=1 // loop_header
      %s21 = sphi 0, %s25
      %p22 = scmp.ge.s32.totalorder %s21, 4
      %s31 = sphi 0, %s33
      %s34 = sphi 0, %s31
      %s35 = sphi 0, %s34
      %s51 = sphi 0, %s35
      %s55 = sphi 0, %s55
      %s57 = sphi 0, %s55
      %s58 = sphi 0, %s57
      %s72 = sphi 0, %s58
      %s76 = sphi 0, %s76
      %s78 = sphi 0, %s76
      %s79 = sphi 0, %s78
      %s93 = sphi 0, %s79
      %s97 = sphi 0, %s97
      %s99 = sphi 0, %s97
      %s100 = sphi 0, %s99
      %s114 = sphi 0, %s100
      %s118 = sphi 0, %s118
      %s120 = sphi 0, %s118
      %s121 = sphi 0, %s120
      %s135 = sphi 0, %s121
      %s139 = sphi 0, %s139
      %s141 = sphi 0, %s139
      %s142 = sphi 0, %s141
      %s156 = sphi 0, %s142
      %s160 = sphi 0, %s160
      %s162 = sphi 0, %s160
      %s163 = sphi 0, %s162
      %s177 = sphi 0, %s163
      %s183 = sphi 0, %s185
      %s186 = sphi 0, %s183
      %s187 = sphi 0, %s186
      %s203 = sphi 0, %s187
    $region4: #{tpu_custom_call.1} parent=1 // loop_header_branch
      %24 = sbr.rel (%p22) target = $region8
    $region5: #{tpu_custom_call.1} parent=1 // loop_body
      %s26 = ssub.s32 %s21, 1
      %s27 = ssub.s32 %s21, 2
      %s28 = sadd.s32 %s21, 1
      %s29 = ssub.s32 %s21, %s28
      %p30 = scmp.eq.s32.totalorder %s29, 0
      %s32 = sadd.s32 %s31, 1
      %s33 = scalar_select %p30, %s31, %s32
      %p36 = pneg %p30
      %p37 = scmp.eq.s32.totalorder %s21, 1
      %p38 = por %p36, %p37
      %p39 = scmp.ne.s32.totalorder %s31, %s34
      %p40 = scmp.eq.s32.totalorder %s21, 0
      %p41 = por %p39, %p40
      %p42 = scmp.ne.s32.totalorder %s31, %s34
      %p43 = scmp.eq.s32.totalorder %s26, 1
      %p44 = por %p42, %p43
      %p45 = scmp.ne.s32.totalorder %s34, %s35
      %p46 = scmp.eq.s32.totalorder %s26, 0
      %p47 = por %p45, %p46
      %p48 = scmp.ne.s32.totalorder %s34, %s35
      %p49 = scmp.eq.s32.totalorder %s27, 1
      %p50 = por %p48, %p49
      %p52 = scmp.ne.s32.totalorder %s35, %s51
      %p53 = scmp.eq.s32.totalorder %s27, 0
      %p54 = por %p52, %p53
      %s56 = sadd.s32 %s55, 1
      %p59 = scmp.eq.s32.totalorder %s21, 1
      %p60 = scmp.ne.s32.totalorder %s55, %s57
      %p61 = scmp.eq.s32.totalorder %s21, 0
      %p62 = por %p60, %p61
      %p63 = scmp.ne.s32.totalorder %s55, %s57
      %p64 = scmp.eq.s32.totalorder %s26, 1
      %p65 = por %p63, %p64
      %p66 = scmp.ne.s32.totalorder %s57, %s58
      %p67 = scmp.eq.s32.totalorder %s26, 0
      %p68 = por %p66, %p67
      %p69 = scmp.ne.s32.totalorder %s57, %s58
      %p70 = scmp.eq.s32.totalorder %s27, 1
      %p71 = por %p69, %p70
      %p73 = scmp.ne.s32.totalorder %s58, %s72
      %p74 = scmp.eq.s32.totalorder %s27, 0
      %p75 = por %p73, %p74
      %s77 = sadd.s32 %s76, 1
      %p80 = scmp.eq.s32.totalorder %s21, 1
      %p81 = scmp.ne.s32.totalorder %s76, %s78
      %p82 = scmp.eq.s32.totalorder %s21, 0
      %p83 = por %p81, %p82
      %p84 = scmp.ne.s32.totalorder %s76, %s78
      %p85 = scmp.eq.s32.totalorder %s26, 1
      %p86 = por %p84, %p85
      %p87 = scmp.ne.s32.totalorder %s78, %s79
      %p88 = scmp.eq.s32.totalorder %s26, 0
      %p89 = por %p87, %p88
      %p90 = scmp.ne.s32.totalorder %s78, %s79
      %p91 = scmp.eq.s32.totalorder %s27, 1
      %p92 = por %p90, %p91
      %p94 = scmp.ne.s32.totalorder %s79, %s93
      %p95 = scmp.eq.s32.totalorder %s27, 0
      %p96 = por %p94, %p95
      %s98 = sadd.s32 %s97, 1
      %p101 = scmp.eq.s32.totalorder %s21, 1
      %p102 = scmp.ne.s32.totalorder %s97, %s99
      %p103 = scmp.eq.s32.totalorder %s21, 0
      %p104 = por %p102, %p103
      %p105 = scmp.ne.s32.totalorder %s97, %s99
      %p106 = scmp.eq.s32.totalorder %s26, 1
      %p107 = por %p105, %p106
      %p108 = scmp.ne.s32.totalorder %s99, %s100
      %p109 = scmp.eq.s32.totalorder %s26, 0
      %p110 = por %p108, %p109
      %p111 = scmp.ne.s32.totalorder %s99, %s100
      %p112 = scmp.eq.s32.totalorder %s27, 1
      %p113 = por %p111, %p112
      %p115 = scmp.ne.s32.totalorder %s100, %s114
      %p116 = scmp.eq.s32.totalorder %s27, 0
      %p117 = por %p115, %p116
      %s119 = sadd.s32 %s118, 1
      %p122 = scmp.eq.s32.totalorder %s21, 1
      %p123 = scmp.ne.s32.totalorder %s118, %s120
      %p124 = scmp.eq.s32.totalorder %s21, 0
      %p125 = por %p123, %p124
      %p126 = scmp.ne.s32.totalorder %s118, %s120
      %p127 = scmp.eq.s32.totalorder %s26, 1
      %p128 = por %p126, %p127
      %p129 = scmp.ne.s32.totalorder %s120, %s121
      %p130 = scmp.eq.s32.totalorder %s26, 0
      %p131 = por %p129, %p130
      %p132 = scmp.ne.s32.totalorder %s120, %s121
      %p133 = scmp.eq.s32.totalorder %s27, 1
      %p134 = por %p132, %p133
      %p136 = scmp.ne.s32.totalorder %s121, %s135
      %p137 = scmp.eq.s32.totalorder %s27, 0
      %p138 = por %p136, %p137
      %s140 = sadd.s32 %s139, 1
      %p143 = scmp.eq.s32.totalorder %s21, 1
      %p144 = scmp.ne.s32.totalorder %s139, %s141
      %p145 = scmp.eq.s32.totalorder %s21, 0
      %p146 = por %p144, %p145
      %p147 = scmp.ne.s32.totalorder %s139, %s141
      %p148 = scmp.eq.s32.totalorder %s26, 1
      %p149 = por %p147, %p148
      %p150 = scmp.ne.s32.totalorder %s141, %s142
      %p151 = scmp.eq.s32.totalorder %s26, 0
      %p152 = por %p150, %p151
      %p153 = scmp.ne.s32.totalorder %s141, %s142
      %p154 = scmp.eq.s32.totalorder %s27, 1
      %p155 = por %p153, %p154
      %p157 = scmp.ne.s32.totalorder %s142, %s156
      %p158 = scmp.eq.s32.totalorder %s27, 0
      %p159 = por %p157, %p158
      %s161 = sadd.s32 %s160, 1
      %p164 = scmp.eq.s32.totalorder %s21, 1
      %p165 = scmp.ne.s32.totalorder %s160, %s162
      %p166 = scmp.eq.s32.totalorder %s21, 0
      %p167 = por %p165, %p166
      %p168 = scmp.ne.s32.totalorder %s160, %s162
      %p169 = scmp.eq.s32.totalorder %s26, 1
      %p170 = por %p168, %p169
      %p171 = scmp.ne.s32.totalorder %s162, %s163
      %p172 = scmp.eq.s32.totalorder %s26, 0
      %p173 = por %p171, %p172
      %p174 = scmp.ne.s32.totalorder %s162, %s163
      %p175 = scmp.eq.s32.totalorder %s27, 1
      %p176 = por %p174, %p175
      %p178 = scmp.ne.s32.totalorder %s163, %s177
      %p179 = scmp.eq.s32.totalorder %s27, 0
      %p180 = por %p178, %p179
      %s181 = ssub.s32 %s21, %s28
      %p182 = scmp.eq.s32.totalorder %s181, 0
      %s184 = sadd.s32 %s183, 1
      %s185 = scalar_select %p182, %s183, %s184
      %p188 = pneg %p182
      %p189 = scmp.eq.s32.totalorder %s21, 1
      %p190 = por %p188, %p189
      %p191 = scmp.ne.s32.totalorder %s183, %s186
      %p192 = scmp.eq.s32.totalorder %s21, 0
      %p193 = por %p191, %p192
      %p194 = scmp.ne.s32.totalorder %s183, %s186
      %p195 = scmp.eq.s32.totalorder %s26, 1
      %p196 = por %p194, %p195
      %p197 = scmp.ne.s32.totalorder %s186, %s187
      %p198 = scmp.eq.s32.totalorder %s26, 0
      %p199 = por %p197, %p198
      %p200 = scmp.ne.s32.totalorder %s186, %s187
      %p201 = scmp.eq.s32.totalorder %s27, 1
      %p202 = por %p200, %p201
      %p204 = scmp.ne.s32.totalorder %s187, %s203
      %p205 = scmp.eq.s32.totalorder %s27, 0
      %p206 = por %p204, %p205
      %p207 = scmp.le.s32.totalorder 1, %s21
      %p208 = scmp.lt.s32.totalorder %s21, 3
      %p209 = pnand %p207, %p208
      %p210 = pneg %p209
      // Predicated region
      $region9: #{tpu_custom_call.1} parent=5 // pred_check
        _
      $region10: #{tpu_custom_call.1} parent=5 // pred_check_branch
        %212 = sbr.rel (%p209) target = $region12
      $region11: #{tpu_custom_call.1} parent=5 // pred_region
        %s213 = ssub.s32 %s21, 1
        // Predicated region
        $region13: #{tpu_custom_call.1} parent=11 // pred_check
          %p214 = pneg %p68
        $region14: #{tpu_custom_call.1} parent=11 // pred_check_branch
          %216 = sbr.rel (%p214) target = $region16
        $region15: #{tpu_custom_call.1} parent=11 // pred_region
          %218 = vsyncadd [#allocation6], 0
          %s219 = sshll.u32 %s1, 4
          %s220 = int_to_ptr.hbm [resolvable:$true] %s219
          %s221 = sshll.u32 [#allocation5], 4
          %s222 = int_to_ptr.vmem [resolvable:$true] %s221
          %227 = dma.hbm_to_vmem [thread:$0]  %s220, 2048, %s222, [#allocation6], 128, 128, 8
        $region16: #{tpu_custom_call.1} parent=11 // pred_fallthru
          _
        // Predicated region
        $region17: #{tpu_custom_call.1} parent=11 // pred_check
          %p228 = pneg %p89
        $region18: #{tpu_custom_call.1} parent=11 // pred_check_branch
          %230 = sbr.rel (%p228) target = $region20
        $region19: #{tpu_custom_call.1} parent=11 // pred_region
          %232 = vsyncadd [#allocation6], 0
          %s234 = sshll.u32 %s2, 4
          %s235 = int_to_ptr.hbm [resolvable:$true] %s234
          %s236 = sshll.u32 [#allocation7], 4
          %s237 = int_to_ptr.vmem [resolvable:$true] %s236
          %239 = dma.hbm_to_vmem [thread:$0]  %s235, 32, %s237, [#allocation6]
        $region20: #{tpu_custom_call.1} parent=11 // pred_fallthru
          _
        // Predicated region
        $region21: #{tpu_custom_call.1} parent=11 // pred_check
          %p240 = pneg %p110
        $region22: #{tpu_custom_call.1} parent=11 // pred_check_branch
          %242 = sbr.rel (%p240) target = $region24
        $region23: #{tpu_custom_call.1} parent=11 // pred_region
          %244 = vsyncadd [#allocation9], 0
          %s245 = sshll.u32 %s3, 4
          %s246 = int_to_ptr.hbm [resolvable:$true] %s245
          %s247 = sshll.u32 [#allocation8], 4
          %s248 = int_to_ptr.vmem [resolvable:$true] %s247
          %253 = dma.hbm_to_vmem [thread:$0]  %s246, 2048, %s248, [#allocation9], 64, 64, 4
        $region24: #{tpu_custom_call.1} parent=11 // pred_fallthru
          _
        // Predicated region
        $region25: #{tpu_custom_call.1} parent=11 // pred_check
          %p254 = pneg %p131
        $region26: #{tpu_custom_call.1} parent=11 // pred_check_branch
          %256 = sbr.rel (%p254) target = $region28
        $region27: #{tpu_custom_call.1} parent=11 // pred_region
          _
        $region28: #{tpu_custom_call.1} parent=11 // pred_fallthru
          _
        // Predicated region
        $region29: #{tpu_custom_call.1} parent=11 // pred_check
          %p257 = pneg %p152
        $region30: #{tpu_custom_call.1} parent=11 // pred_check_branch
          %259 = sbr.rel (%p257) target = $region32
        $region31: #{tpu_custom_call.1} parent=11 // pred_region
          _
        $region32: #{tpu_custom_call.1} parent=11 // pred_fallthru
          _
        // Predicated region
        $region33: #{tpu_custom_call.1} parent=11 // pred_check
          %p260 = pneg %p173
        $region34: #{tpu_custom_call.1} parent=11 // pred_check_branch
          %262 = sbr.rel (%p260) target = $region36
        $region35: #{tpu_custom_call.1} parent=11 // pred_region
          _
        $region36: #{tpu_custom_call.1} parent=11 // pred_fallthru
          _
      $region12: #{tpu_custom_call.1} parent=5 // pred_fallthru
        _
      %p263 = scmp.lt.s32.totalorder %s21, 2
      // Predicated region
      $region37: #{tpu_custom_call.1} parent=5 // pred_check
        %p264 = pneg %p263
      $region38: #{tpu_custom_call.1} parent=5 // pred_check_branch
        %266 = sbr.rel (%p264) target = $region40
      $region39: #{tpu_custom_call.1} parent=5 // pred_region
        // Predicated region
        $region41: #{tpu_custom_call.1} parent=39 // pred_check
          %p267 = pneg %p41
        $region42: #{tpu_custom_call.1} parent=39 // pred_check_branch
          %269 = sbr.rel (%p267) target = $region44
        $region43: #{tpu_custom_call.1} parent=39 // pred_region
          %s270 = sand.u32 %s31, 1
          %s271 = scalar_lea.sflag [#allocation3], %s270
          %s272 = sand.u32 %s31, 1
          %s273 = smul.addr %s272, 4
          %s274 = scalar_lea.vmem [#allocation2], %s273
          %276 = vsyncadd %s271, 0
          %s277 = smul.addr %s21, 4
          %s278 = scalar_lea.hbm %s0, %s277
          %s280 = sshll.u32 %s278, 4
          %s281 = int_to_ptr.hbm [resolvable:$true] %s280
          %s282 = sshll.u32 %s274, 4
          %s283 = int_to_ptr.vmem [resolvable:$true] %s282
          %285 = dma.hbm_to_vmem [thread:$0]  %s281, 64, %s283, %s271
        $region44: #{tpu_custom_call.1} parent=39 // pred_fallthru
          _
      $region40: #{tpu_custom_call.1} parent=5 // pred_fallthru
        _
      %p286 = scmp.le.s32.totalorder 1, %s21
      %p287 = scmp.lt.s32.totalorder %s21, 3
      %p288 = pnand %p286, %p287
      %p289 = pneg %p288
      // Predicated region
      $region45: #{tpu_custom_call.1} parent=5 // pred_check
        _
      $region46: #{tpu_custom_call.1} parent=5 // pred_check_branch
        %291 = sbr.rel (%p288) target = $region48
      $region47: #{tpu_custom_call.1} parent=5 // pred_region
        %s292 = ssub.s32 %s21, 1
        %s293 = sand.u32 %s34, 1
        %s294 = scalar_lea.sflag [#allocation3], %s293
        %s295 = sand.u32 %s34, 1
        %s296 = smul.addr %s295, 4
        %s297 = scalar_lea.vmem [#allocation2], %s296
        // Predicated region
        $region49: #{tpu_custom_call.1} parent=47 // pred_check
          %p298 = pneg %p47
        $region50: #{tpu_custom_call.1} parent=47 // pred_check_branch
          %300 = sbr.rel (%p298) target = $region52
        $region51: #{tpu_custom_call.1} parent=47 // pred_region
          %302 = dma.done %s294, 64
        $region52: #{tpu_custom_call.1} parent=47 // pred_fallthru
          _
        // Predicated region
        $region53: #{tpu_custom_call.1} parent=47 // pred_check
          %p303 = pneg %p68
        $region54: #{tpu_custom_call.1} parent=47 // pred_check_branch
          %305 = sbr.rel (%p303) target = $region56
        $region55: #{tpu_custom_call.1} parent=47 // pred_region
          %307 = dma.done [#allocation6], 2048
        $region56: #{tpu_custom_call.1} parent=47 // pred_fallthru
          _
        // Predicated region
        $region57: #{tpu_custom_call.1} parent=47 // pred_check
          %p308 = pneg %p89
        $region58: #{tpu_custom_call.1} parent=47 // pred_check_branch
          %310 = sbr.rel (%p308) target = $region60
        $region59: #{tpu_custom_call.1} parent=47 // pred_region
          %312 = dma.done [#allocation6], 32
        $region60: #{tpu_custom_call.1} parent=47 // pred_fallthru
          _
        // Predicated region
        $region61: #{tpu_custom_call.1} parent=47 // pred_check
          %p313 = pneg %p110
        $region62: #{tpu_custom_call.1} parent=47 // pred_check_branch
          %315 = sbr.rel (%p313) target = $region64
        $region63: #{tpu_custom_call.1} parent=47 // pred_region
          %317 = dma.done [#allocation9], 2048
        $region64: #{tpu_custom_call.1} parent=47 // pred_fallthru
          _
        %s318 = sand.u32 %s34, 1
        %s319 = scalar_lea.sflag [#allocation3], %s318
        %s320 = sand.u32 %s34, 1
        %s321 = smul.addr %s320, 4
        %s322 = scalar_lea.vmem [#allocation2], %s321
        %p323 = pneg %p47
        %p324 = pneg %p44
        %p325 = pneg %p68
        %p326 = pneg %p65
        %p327 = pneg %p89
        %p328 = pneg %p86
        %p329 = pneg %p110
        %p330 = pneg %p107
        %p331 = pneg %p131
        %p332 = pneg %p128
        %p333 = pneg %p152
        %p334 = pneg %p149
        %p335 = pneg %p173
        %p336 = pneg %p170
        %p337 = pneg %p199
        %p338 = pneg %p196
        %s339 = sand.u32 %s186, 1
        %s340 = scalar_lea.sflag [#allocation4], %s339
        %s341 = sand.u32 %s186, 1
        %s342 = smul.addr %s341, 8
        %s343 = scalar_lea.vmem [#allocation10], %s342
        %v344 = vld [vmem:[%s297] sm:$0xf]
        %v345 = vld [vmem:[#allocation5] sm:$0xff]
        %v346 = vld [vmem:[#allocation5 + $0x8] sm:$0xff]
        %v347 = vld [vmem:[#allocation5 + $0x10] sm:$0xff]
        %v348 = vld [vmem:[#allocation5 + $0x18] sm:$0xff]
        %v349 = vld [vmem:[#allocation5 + $0x20] sm:$0xff]
        %v350 = vld [vmem:[#allocation5 + $0x28] sm:$0xff]
        %v351 = vld [vmem:[#allocation5 + $0x30] sm:$0xff]
        %v352 = vld [vmem:[#allocation5 + $0x38] sm:$0xff]
        %v353 = vld [vmem:[#allocation5 + $0x40] sm:$0xff]
        %v354 = vld [vmem:[#allocation5 + $0x48] sm:$0xff]
        %v355 = vld [vmem:[#allocation5 + $0x50] sm:$0xff]
        %v356 = vld [vmem:[#allocation5 + $0x58] sm:$0xff]
        %v357 = vld [vmem:[#allocation5 + $0x60] sm:$0xff]
        %v358 = vld [vmem:[#allocation5 + $0x68] sm:$0xff]
        %v359 = vld [vmem:[#allocation5 + $0x70] sm:$0xff]
        %v360 = vld [vmem:[#allocation5 + $0x78] sm:$0xff]
        %v361 = vld [vmem:[#allocation7] sm:$0x3]
        %v363 = vperm.slane %v361, 0
        %v364 = vperm.slane %v361, 1
        %v383 = vunpack.c.l.b16 %v345
        %v384 = vunpack.c.h.b16 %v345
        %v385 = vunpack.c.l.b16 %v346
        %v386 = vunpack.c.h.b16 %v346
        %v387 = vunpack.c.l.b16 %v347
        %v388 = vunpack.c.h.b16 %v347
        %v389 = vunpack.c.l.b16 %v348
        %v390 = vunpack.c.h.b16 %v348
        %v391 = vunpack.c.l.b16 %v349
        %v392 = vunpack.c.h.b16 %v349
        %v393 = vunpack.c.l.b16 %v350
        %v394 = vunpack.c.h.b16 %v350
        %v395 = vunpack.c.l.b16 %v351
        %v396 = vunpack.c.h.b16 %v351
        %v397 = vunpack.c.l.b16 %v352
        %v398 = vunpack.c.h.b16 %v352
        %v399 = vunpack.c.l.b16 %v353
        %v400 = vunpack.c.h.b16 %v353
        %v401 = vunpack.c.l.b16 %v354
        %v402 = vunpack.c.h.b16 %v354
        %v403 = vunpack.c.l.b16 %v355
        %v404 = vunpack.c.h.b16 %v355
        %v405 = vunpack.c.l.b16 %v356
        %v406 = vunpack.c.h.b16 %v356
        %v407 = vunpack.c.l.b16 %v357
        %v408 = vunpack.c.h.b16 %v357
        %v409 = vunpack.c.l.b16 %v358
        %v410 = vunpack.c.h.b16 %v358
        %v411 = vunpack.c.l.b16 %v359
        %v412 = vunpack.c.h.b16 %v359
        %v413 = vunpack.c.l.b16 %v360
        %v414 = vunpack.c.h.b16 %v360
        %v415 = vpack.c.b16 %v385, %v383
        %v416 = vpack.c.b16 %v386, %v384
        %v417 = vpack.c.b16 %v389, %v387
        %v418 = vpack.c.b16 %v390, %v388
        %v419 = vpack.c.b16 %v393, %v391
        %v420 = vpack.c.b16 %v394, %v392
        %v421 = vpack.c.b16 %v397, %v395
        %v422 = vpack.c.b16 %v398, %v396
        %v423 = vpack.c.b16 %v401, %v399
        %v424 = vpack.c.b16 %v402, %v400
        %v425 = vpack.c.b16 %v405, %v403
        %v426 = vpack.c.b16 %v406, %v404
        %v427 = vpack.c.b16 %v409, %v407
        %v428 = vpack.c.b16 %v410, %v408
        %v429 = vpack.c.b16 %v413, %v411
        %v430 = vpack.c.b16 %v414, %v412
        %447 = vmatpush.bf16.msra.mxu0 %v429
        %448 = vmatpush.bf16.msra.mxu0 %v427
        %449 = vmatpush.bf16.msra.mxu0 %v425
        %450 = vmatpush.bf16.msra.mxu0 %v423
        %451 = vmatpush.bf16.msra.mxu0 %v421
        %452 = vmatpush.bf16.msra.mxu0 %v419
        %453 = vmatpush.bf16.msra.mxu0 %v417
        %454 = vmatpush.bf16.msra.mxu0 %v415
        %455 = vmatmul.bf16.gmra.mxu0 %v344
        %v456 = vpop.f32.mrf.mxu0
        %v457 = vadd.f32 %v363, %v456
        %v458 = vpop.f32.mrf.mxu0
        %459 = vdwg.mxu0
        %460 = vmatpush.bf16.msra.mxu0 %v430
        %461 = vmatpush.bf16.msra.mxu0 %v428
        %462 = vmatpush.bf16.msra.mxu0 %v426
        %463 = vmatpush.bf16.msra.mxu0 %v424
        %464 = vmatpush.bf16.msra.mxu0 %v422
        %465 = vmatpush.bf16.msra.mxu0 %v420
        %466 = vmatpush.bf16.msra.mxu0 %v418
        %467 = vmatpush.bf16.msra.mxu0 %v416
        %468 = vmatmul.bf16.gmra.mxu0 %v344
        %v469 = vpop.f32.mrf.mxu0
        %v470 = vadd.f32 %v364, %v469
        %v471 = vpop.f32.mrf.mxu0
        %472 = vdwg.mxu0
        %v473 = vmax.f32 %v457, 0.0
        %v474 = vmax.f32 %v470, 0.0
        %v475 = vpack.c.bf16 %v473, %v473
        %v476 = vpack.c.bf16 %v474, %v474
        %v477 = vld [vmem:[#allocation8] sm:$0xf]
        %v478 = vld [vmem:[#allocation8 + $0x4] sm:$0xf]
        %v479 = vld [vmem:[#allocation8 + $0x8] sm:$0xf]
        %v480 = vld [vmem:[#allocation8 + $0xc] sm:$0xf]
        %v481 = vld [vmem:[#allocation8 + $0x10] sm:$0xf]
        %v482 = vld [vmem:[#allocation8 + $0x14] sm:$0xf]
        %v483 = vld [vmem:[#allocation8 + $0x18] sm:$0xf]
        %v484 = vld [vmem:[#allocation8 + $0x1c] sm:$0xf]
        %v485 = vld [vmem:[#allocation8 + $0x20] sm:$0xf]
        %v486 = vld [vmem:[#allocation8 + $0x24] sm:$0xf]
        %v487 = vld [vmem:[#allocation8 + $0x28] sm:$0xf]
        %v488 = vld [vmem:[#allocation8 + $0x2c] sm:$0xf]
        %v489 = vld [vmem:[#allocation8 + $0x30] sm:$0xf]
        %v490 = vld [vmem:[#allocation8 + $0x34] sm:$0xf]
        %v491 = vld [vmem:[#allocation8 + $0x38] sm:$0xf]
        %v492 = vld [vmem:[#allocation8 + $0x3c] sm:$0xf]
        %v493 = vld [vmem:[#allocation8 + $0x40] sm:$0xf]
        %v494 = vld [vmem:[#allocation8 + $0x44] sm:$0xf]
        %v495 = vld [vmem:[#allocation8 + $0x48] sm:$0xf]
        %v496 = vld [vmem:[#allocation8 + $0x4c] sm:$0xf]
        %v497 = vld [vmem:[#allocation8 + $0x50] sm:$0xf]
        %v498 = vld [vmem:[#allocation8 + $0x54] sm:$0xf]
        %v499 = vld [vmem:[#allocation8 + $0x58] sm:$0xf]
        %v500 = vld [vmem:[#allocation8 + $0x5c] sm:$0xf]
        %v501 = vld [vmem:[#allocation8 + $0x60] sm:$0xf]
        %v502 = vld [vmem:[#allocation8 + $0x64] sm:$0xf]
        %v503 = vld [vmem:[#allocation8 + $0x68] sm:$0xf]
        %v504 = vld [vmem:[#allocation8 + $0x6c] sm:$0xf]
        %v505 = vld [vmem:[#allocation8 + $0x70] sm:$0xf]
        %v506 = vld [vmem:[#allocation8 + $0x74] sm:$0xf]
        %v507 = vld [vmem:[#allocation8 + $0x78] sm:$0xf]
        %v508 = vld [vmem:[#allocation8 + $0x7c] sm:$0xf]
        %v509 = vld [vmem:[%s4] sm:$0x1]
        %v511 = vperm.slane %v509, 0
        %v545 = vunpack.c.l.b16 %v477
        %v546 = vunpack.c.l.b16 %v478
        %v547 = vunpack.c.l.b16 %v479
        %v548 = vunpack.c.l.b16 %v480
        %v549 = vunpack.c.l.b16 %v481
        %v550 = vunpack.c.l.b16 %v482
        %v551 = vunpack.c.l.b16 %v483
        %v552 = vunpack.c.l.b16 %v484
        %v553 = vunpack.c.l.b16 %v485
        %v554 = vunpack.c.l.b16 %v486
        %v555 = vunpack.c.l.b16 %v487
        %v556 = vunpack.c.l.b16 %v488
        %v557 = vunpack.c.l.b16 %v489
        %v558 = vunpack.c.l.b16 %v490
        %v559 = vunpack.c.l.b16 %v491
        %v560 = vunpack.c.l.b16 %v492
        %v561 = vunpack.c.l.b16 %v493
        %v562 = vunpack.c.l.b16 %v494
        %v563 = vunpack.c.l.b16 %v495
        %v564 = vunpack.c.l.b16 %v496
        %v565 = vunpack.c.l.b16 %v497
        %v566 = vunpack.c.l.b16 %v498
        %v567 = vunpack.c.l.b16 %v499
        %v568 = vunpack.c.l.b16 %v500
        %v569 = vunpack.c.l.b16 %v501
        %v570 = vunpack.c.l.b16 %v502
        %v571 = vunpack.c.l.b16 %v503
        %v572 = vunpack.c.l.b16 %v504
        %v573 = vunpack.c.l.b16 %v505
        %v574 = vunpack.c.l.b16 %v506
        %v575 = vunpack.c.l.b16 %v507
        %v576 = vunpack.c.l.b16 %v508
        %v577 = vpack.c.b16 %v546, %v545
        %v578 = vpack.c.b16 %v548, %v547
        %v579 = vpack.c.b16 %v550, %v549
        %v580 = vpack.c.b16 %v552, %v551
        %v581 = vpack.c.b16 %v554, %v553
        %v582 = vpack.c.b16 %v556, %v555
        %v583 = vpack.c.b16 %v558, %v557
        %v584 = vpack.c.b16 %v560, %v559
        %v585 = vpack.c.b16 %v562, %v561
        %v586 = vpack.c.b16 %v564, %v563
        %v587 = vpack.c.b16 %v566, %v565
        %v588 = vpack.c.b16 %v568, %v567
        %v589 = vpack.c.b16 %v570, %v569
        %v590 = vpack.c.b16 %v572, %v571
        %v591 = vpack.c.b16 %v574, %v573
        %v592 = vpack.c.b16 %v576, %v575
        %609 = vmatpush.bf16.msra.mxu0 %v584
        %610 = vmatpush.bf16.msra.mxu0 %v583
        %611 = vmatpush.bf16.msra.mxu0 %v582
        %612 = vmatpush.bf16.msra.mxu0 %v581
        %613 = vmatpush.bf16.msra.mxu0 %v580
        %614 = vmatpush.bf16.msra.mxu0 %v579
        %615 = vmatpush.bf16.msra.mxu0 %v578
        %616 = vmatpush.bf16.msra.mxu0 %v577
        %617 = vmatmul.bf16.gmra.mxu0 %v475
        %v618 = vpop.f32.mrf.mxu0
        %v619 = vadd.f32 %v511, %v618
        %v620 = vpop.f32.mrf.mxu0
        %621 = vdwg.mxu0
        %622 = vmatpush.bf16.msra.mxu0 %v592
        %623 = vmatpush.bf16.msra.mxu0 %v591
        %624 = vmatpush.bf16.msra.mxu0 %v590
        %625 = vmatpush.bf16.msra.mxu0 %v589
        %626 = vmatpush.bf16.msra.mxu0 %v588
        %627 = vmatpush.bf16.msra.mxu0 %v587
        %628 = vmatpush.bf16.msra.mxu0 %v586
        %629 = vmatpush.bf16.msra.mxu0 %v585
        %630 = vmatmul.bf16.gmra.mxu0 %v476
        %v631 = vpop.f32.mrf.mxu0
        %v632 = vadd.f32 %v619, %v631
        %v633 = vpop.f32.mrf.mxu0
        %634 = vdwg.mxu0
        %635 = vadd.xlane.f32.xlu0 %v632
        %v636 = vpop.xlane.xlu0 %635
        %v637 = vrcp.pop 128.0
        %v638 = vmul.f32 128.0, %v637
        %v639 = vsub.f32 1.0, %v638
        %v640 = vmul.f32 %v637, %v639
        %v641 = vadd.f32 %v637, %v640
        %vm642 = vweird.f32 %v637
        %v643 = vsel %vm642, %v637, %v641
        %v644 = vmul.f32 %v636, %v643
        %v645 = vmul.f32 %v632, %v632
        %646 = vadd.xlane.f32.xlu0 %v645
        %v647 = vpop.xlane.xlu0 %646
        %v648 = vmul.f32 %v647, %v643
        %v649 = vmul.f32 %v644, %v644
        %v650 = vsub.f32 %v648, %v649
        %v651 = vld [vmem:[%s5] sm:$0x1]
        %v652 = vadd.f32 %v650, 1e-05
        %v653 = vrsqrt.pop %v652
        %v654 = vmul.f32 %v653, %v652
        %v655 = vmul.f32 %v654, %v653
        %v656 = vmul.f32 0.5, %v655
        %v657 = vsub.f32 1.5, %v656
        %v658 = vmul.f32 %v653, %v657
        %vm659 = vweird.f32 %v652
        %vm660 = vweird.f32 %v653
        %vm661 = vmor %vm659, %vm660
        %v662 = vsel %vm661, %v653, %v658
        %v664 = vperm.slane %v651, 0
        %v666 = vmul.f32 %v664, %v662
        %v667 = vld [vmem:[%s6] sm:$0x1]
        %v668 = vmul.f32 %v644, %v666
        %v670 = vperm.slane %v667, 0
        %v672 = vsub.f32 %v670, %v668
        %v673 = vmul.f32 %v632, %v666
        %v674 = vadd.f32 %v673, %v672
        %675 = vst [vmem:[%s343] sm:$0xff] %v674
        %s676 = sand.u32 %s186, 1
        %s677 = scalar_lea.sflag [#allocation4], %s676
        %s678 = sand.u32 %s186, 1
        %s679 = smul.addr %s678, 8
        %s680 = scalar_lea.vmem [#allocation10], %s679
        // Predicated region
        $region65: #{tpu_custom_call.1} parent=47 // pred_check
          %p681 = pneg %p196
        $region66: #{tpu_custom_call.1} parent=47 // pred_check_branch
          %683 = sbr.rel (%p681) target = $region68
        $region67: #{tpu_custom_call.1} parent=47 // pred_region
          %685 = vsyncadd %s677, 0
          %s686 = smul.addr %s26, 8
          %s687 = scalar_lea.hbm %s7, %s686
          %s689 = sshll.u32 %s680, 4
          %s690 = int_to_ptr.vmem [resolvable:$true] %s689
          %s691 = sshll.u32 %s687, 4
          %s692 = int_to_ptr.hbm [resolvable:$true] %s691
          %694 = dma.vmem_to_hbm [thread:$0]  %s690, 128, %s692, %s677
        $region68: #{tpu_custom_call.1} parent=47 // pred_fallthru
          _
      $region48: #{tpu_custom_call.1} parent=5 // pred_fallthru
        _
      %p695 = scmp.le.s32.totalorder 2, %s21
      // Predicated region
      $region69: #{tpu_custom_call.1} parent=5 // pred_check
        %p696 = pneg %p695
      $region70: #{tpu_custom_call.1} parent=5 // pred_check_branch
        %698 = sbr.rel (%p696) target = $region72
      $region71: #{tpu_custom_call.1} parent=5 // pred_region
        %s699 = ssub.s32 %s21, 2
        // Predicated region
        $region73: #{tpu_custom_call.1} parent=71 // pred_check
          %p700 = pneg %p202
        $region74: #{tpu_custom_call.1} parent=71 // pred_check_branch
          %702 = sbr.rel (%p700) target = $region76
        $region75: #{tpu_custom_call.1} parent=71 // pred_region
          %s703 = sand.u32 %s187, 1
          %s704 = scalar_lea.sflag [#allocation4], %s703
          %s705 = sand.u32 %s187, 1
          %s706 = smul.addr %s705, 8
          %s707 = scalar_lea.vmem [#allocation10], %s706
          %709 = dma.done %s704, 128
        $region76: #{tpu_custom_call.1} parent=71 // pred_fallthru
          _
      $region72: #{tpu_custom_call.1} parent=5 // pred_fallthru
        _
    $region6: #{tpu_custom_call.1} parent=1 // loop_footer
      %s25 = sadd.s32 1, %s21
    $region7: #{tpu_custom_call.1} parent=1 // loop_footer_branch
      %20 = sbr.rel target = $region3
    $region8: #{tpu_custom_call.1} parent=1 // loop_exit
      _
    %710 = vsyncpa [#allocation3], 1
    %s711 = scalar_lea.sflag [#allocation3], 1
    %712 = vsyncpa %s711, 1
    %713 = vsyncpa [#allocation6], 1
    %714 = vsyncpa [#allocation9], 1
    %715 = vsyncpa [#allocation4], 1
    %s716 = scalar_lea.sflag [#allocation4], 1
    %717 = vsyncpa %s716, 1

// kernel: tpu_custom_call.1
$region0: #{tpu_custom_call.1}
  #allocation0 [shape = 'u32[]', space=smem, size = 0x4, offset = 0x4, fixed_abs, tag = 'smem constant byte address 0x4 - core index']
  #allocation1 [shape = 'u32[72,128]{1,0:T(1,128)}', space=vmem, size = 0x9000, scoped, tag = 'internal scratch']
  %s0 = inlined_call_operand.hbm [shape: bf16[16,128], index: 0, kind: input, shape index: {}]
  %s1 = inlined_call_operand.hbm [shape: bf16[128,256], index: 1, kind: input, shape index: {}]
  %s2 = inlined_call_operand.hbm [shape: f32[1,256], index: 2, kind: input, shape index: {}]
  %s3 = inlined_call_operand.hbm [shape: bf16[256,128], index: 3, kind: input, shape index: {}]
  %s4 = inlined_call_operand.vmem [shape: f32[1,128], index: 4, kind: input, shape index: {}]
  %s5 = inlined_call_operand.vmem [shape: f32[1,128], index: 5, kind: input, shape index: {}]
  %s6 = inlined_call_operand.vmem [shape: f32[1,128], index: 6, kind: input, shape index: {}]
  %s7 = inlined_call_operand.hbm [shape: f32[16,128], index: 7, kind: output, shape index: {}]
  %s8 = sld [smem:[#allocation0]]
  $region77: #{tpu_custom_call.1} parent=0
    _
  %s10 = ssub.s32 1, %s8
  %s11 = scalar_select 0, %s10, %s8
  $region1: #{tpu_custom_call.1} parent=0
    #allocation2 [shape = 'u8[4096]{0}', space=vmem, size = 0x1000, scoped, tag = 'input window, operand 0']
    #allocation3 [shape = 's32[2]{0}', space=sflag, size = 0x8, scoped, tag = 'scoped memory for tpu_custom_call.1']
    #allocation4 [shape = 's32[2]{0}', space=sflag, size = 0x8, scoped, tag = 'scoped memory for tpu_custom_call.1']
    #allocation5 [shape = 'u8[65536]{0}', space=vmem, size = 0x10000, scoped, tag = 'input window, operand 1, single buffered']
    #allocation6 [shape = 's32[1]{0}', space=sflag, size = 0x4, scoped, tag = 'scoped memory for tpu_custom_call.1']
    #allocation7 [shape = 'u8[1024]{0}', space=vmem, size = 0x400, scoped, tag = 'input window, operand 2, single buffered']
    #allocation8 [shape = 'u8[65536]{0}', space=vmem, size = 0x10000, scoped, tag = 'input window, operand 3, single buffered']
    #allocation9 [shape = 's32[1]{0}', space=sflag, size = 0x4, scoped, tag = 'scoped memory for tpu_custom_call.1']
    #allocation10 [shape = 'u8[8192]{0}', space=vmem, size = 0x2000, scoped, tag = 'output window, operand 0']
    %12 = vsyncpa [#allocation3], 0
    %s13 = scalar_lea.sflag [#allocation3], 1
    %14 = vsyncpa %s13, 0
    %15 = vsyncpa [#allocation6], 0
    %16 = vsyncpa [#allocation9], 0
    %17 = vsyncpa [#allocation4], 0
    %s18 = scalar_lea.sflag [#allocation4], 1
    %19 = vsyncpa %s18, 0
    loop: start=0, step=1, limit=4
    $region2: #{tpu_custom_call.1} parent=1 // loop_pre_header
      _
    $region3: #{tpu_custom_call.1} parent=1 // loop_header
      %s21 = sphi 0, %s25
      %p22 = scmp.ge.s32.totalorder %s21, 4
      %s31 = sphi 0, %s33
      %s34 = sphi 0, %s31
      %s35 = sphi 0, %s34
      %s51 = sphi 0, %s35
      %s55 = sphi 0, %s55
      %s57 = sphi 0, %s55
      %s58 = sphi 0, %s57
      %s72 = sphi 0, %s58
      %s76 = sphi 0, %s76
      %s78 = sphi 0, %s76
      %s79 = sphi 0, %s78
      %s93 = sphi 0, %s79
      %s97 = sphi 0, %s97
      %s99 = sphi 0, %s97
      %s100 = sphi 0, %s99
      %s114 = sphi 0, %s100
      %s118 = sphi 0, %s118
      %s120 = sphi 0, %s118
      %s121 = sphi 0, %s120
      %s135 = sphi 0, %s121
      %s139 = sphi 0, %s139
      %s141 = sphi 0, %s139
      %s142 = sphi 0, %s141
      %s156 = sphi 0, %s142
      %s160 = sphi 0, %s160
      %s162 = sphi 0, %s160
      %s163 = sphi 0, %s162
      %s177 = sphi 0, %s163
      %s183 = sphi 0, %s185
      %s186 = sphi 0, %s183
      %s187 = sphi 0, %s186
      %s203 = sphi 0, %s187
    $region4: #{tpu_custom_call.1} parent=1 // loop_header_branch
      %24 = sbr.rel (%p22) target = $region8
    $region5: #{tpu_custom_call.1} parent=1 // loop_body
      %s26 = ssub.s32 %s21, 1
      %s27 = ssub.s32 %s21, 2
      %s28 = sadd.s32 %s21, 1
      %s29 = ssub.s32 %s21, %s28
      %p30 = scmp.eq.s32.totalorder %s29, 0
      %s32 = sadd.s32 %s31, 1
      %s33 = scalar_select %p30, %s31, %s32
      %p36 = pneg %p30
      %p37 = scmp.eq.s32.totalorder %s21, 1
      %p38 = por %p36, %p37
      %p39 = scmp.ne.s32.totalorder %s31, %s34
      %p40 = scmp.eq.s32.totalorder %s21, 0
      %p41 = por %p39, %p40
      %p42 = scmp.ne.s32.totalorder %s31, %s34
      %p43 = scmp.eq.s32.totalorder %s26, 1
      %p44 = por %p42, %p43
      %p45 = scmp.ne.s32.totalorder %s34, %s35
      %p46 = scmp.eq.s32.totalorder %s26, 0
      %p47 = por %p45, %p46
      %p48 = scmp.ne.s32.totalorder %s34, %s35
      %p49 = scmp.eq.s32.totalorder %s27, 1
      %p50 = por %p48, %p49
      %p52 = scmp.ne.s32.totalorder %s35, %s51
      %p53 = scmp.eq.s32.totalorder %s27, 0
      %p54 = por %p52, %p53
      %s56 = sadd.s32 %s55, 1
      %p59 = scmp.eq.s32.totalorder %s21, 1
      %p60 = scmp.ne.s32.totalorder %s55, %s57
      %p61 = scmp.eq.s32.totalorder %s21, 0
      %p62 = por %p60, %p61
      %p63 = scmp.ne.s32.totalorder %s55, %s57
      %p64 = scmp.eq.s32.totalorder %s26, 1
      %p65 = por %p63, %p64
      %p66 = scmp.ne.s32.totalorder %s57, %s58
      %p67 = scmp.eq.s32.totalorder %s26, 0
      %p68 = por %p66, %p67
      %p69 = scmp.ne.s32.totalorder %s57, %s58
      %p70 = scmp.eq.s32.totalorder %s27, 1
      %p71 = por %p69, %p70
      %p73 = scmp.ne.s32.totalorder %s58, %s72
      %p74 = scmp.eq.s32.totalorder %s27, 0
      %p75 = por %p73, %p74
      %s77 = sadd.s32 %s76, 1
      %p80 = scmp.eq.s32.totalorder %s21, 1
      %p81 = scmp.ne.s32.totalorder %s76, %s78
      %p82 = scmp.eq.s32.totalorder %s21, 0
      %p83 = por %p81, %p82
      %p84 = scmp.ne.s32.totalorder %s76, %s78
      %p85 = scmp.eq.s32.totalorder %s26, 1
      %p86 = por %p84, %p85
      %p87 = scmp.ne.s32.totalorder %s78, %s79
      %p88 = scmp.eq.s32.totalorder %s26, 0
      %p89 = por %p87, %p88
      %p90 = scmp.ne.s32.totalorder %s78, %s79
      %p91 = scmp.eq.s32.totalorder %s27, 1
      %p92 = por %p90, %p91
      %p94 = scmp.ne.s32.totalorder %s79, %s93
      %p95 = scmp.eq.s32.totalorder %s27, 0
      %p96 = por %p94, %p95
      %s98 = sadd.s32 %s97, 1
      %p101 = scmp.eq.s32.totalorder %s21, 1
      %p102 = scmp.ne.s32.totalorder %s97, %s99
      %p103 = scmp.eq.s32.totalorder %s21, 0
      %p104 = por %p102, %p103
      %p105 = scmp.ne.s32.totalorder %s97, %s99
      %p106 = scmp.eq.s32.totalorder %s26, 1
      %p107 = por %p105, %p106
      %p108 = scmp.ne.s32.totalorder %s99, %s100
      %p109 = scmp.eq.s32.totalorder %s26, 0
      %p110 = por %p108, %p109
      %p111 = scmp.ne.s32.totalorder %s99, %s100
      %p112 = scmp.eq.s32.totalorder %s27, 1
      %p113 = por %p111, %p112
      %p115 = scmp.ne.s32.totalorder %s100, %s114
      %p116 = scmp.eq.s32.totalorder %s27, 0
      %p117 = por %p115, %p116
      %s119 = sadd.s32 %s118, 1
      %p122 = scmp.eq.s32.totalorder %s21, 1
      %p123 = scmp.ne.s32.totalorder %s118, %s120
      %p124 = scmp.eq.s32.totalorder %s21, 0
      %p125 = por %p123, %p124
      %p126 = scmp.ne.s32.totalorder %s118, %s120
      %p127 = scmp.eq.s32.totalorder %s26, 1
      %p128 = por %p126, %p127
      %p129 = scmp.ne.s32.totalorder %s120, %s121
      %p130 = scmp.eq.s32.totalorder %s26, 0
      %p131 = por %p129, %p130
      %p132 = scmp.ne.s32.totalorder %s120, %s121
      %p133 = scmp.eq.s32.totalorder %s27, 1
      %p134 = por %p132, %p133
      %p136 = scmp.ne.s32.totalorder %s121, %s135
      %p137 = scmp.eq.s32.totalorder %s27, 0
      %p138 = por %p136, %p137
      %s140 = sadd.s32 %s139, 1
      %p143 = scmp.eq.s32.totalorder %s21, 1
      %p144 = scmp.ne.s32.totalorder %s139, %s141
      %p145 = scmp.eq.s32.totalorder %s21, 0
      %p146 = por %p144, %p145
      %p147 = scmp.ne.s32.totalorder %s139, %s141
      %p148 = scmp.eq.s32.totalorder %s26, 1
      %p149 = por %p147, %p148
      %p150 = scmp.ne.s32.totalorder %s141, %s142
      %p151 = scmp.eq.s32.totalorder %s26, 0
      %p152 = por %p150, %p151
      %p153 = scmp.ne.s32.totalorder %s141, %s142
      %p154 = scmp.eq.s32.totalorder %s27, 1
      %p155 = por %p153, %p154
      %p157 = scmp.ne.s32.totalorder %s142, %s156
      %p158 = scmp.eq.s32.totalorder %s27, 0
      %p159 = por %p157, %p158
      %s161 = sadd.s32 %s160, 1
      %p164 = scmp.eq.s32.totalorder %s21, 1
      %p165 = scmp.ne.s32.totalorder %s160, %s162
      %p166 = scmp.eq.s32.totalorder %s21, 0
      %p167 = por %p165, %p166
      %p168 = scmp.ne.s32.totalorder %s160, %s162
      %p169 = scmp.eq.s32.totalorder %s26, 1
      %p170 = por %p168, %p169
      %p171 = scmp.ne.s32.totalorder %s162, %s163
      %p172 = scmp.eq.s32.totalorder %s26, 0
      %p173 = por %p171, %p172
      %p174 = scmp.ne.s32.totalorder %s162, %s163
      %p175 = scmp.eq.s32.totalorder %s27, 1
      %p176 = por %p174, %p175
      %p178 = scmp.ne.s32.totalorder %s163, %s177
      %p179 = scmp.eq.s32.totalorder %s27, 0
      %p180 = por %p178, %p179
      %s181 = ssub.s32 %s21, %s28
      %p182 = scmp.eq.s32.totalorder %s181, 0
      %s184 = sadd.s32 %s183, 1
      %s185 = scalar_select %p182, %s183, %s184
      %p188 = pneg %p182
      %p189 = scmp.eq.s32.totalorder %s21, 1
      %p190 = por %p188, %p189
      %p191 = scmp.ne.s32.totalorder %s183, %s186
      %p192 = scmp.eq.s32.totalorder %s21, 0
      %p193 = por %p191, %p192
      %p194 = scmp.ne.s32.totalorder %s183, %s186
      %p195 = scmp.eq.s32.totalorder %s26, 1
      %p196 = por %p194, %p195
      %p197 = scmp.ne.s32.totalorder %s186, %s187
      %p198 = scmp.eq.s32.totalorder %s26, 0
      %p199 = por %p197, %p198
      %p200 = scmp.ne.s32.totalorder %s186, %s187
      %p201 = scmp.eq.s32.totalorder %s27, 1
      %p202 = por %p200, %p201
      %p204 = scmp.ne.s32.totalorder %s187, %s203
      %p205 = scmp.eq.s32.totalorder %s27, 0
      %p206 = por %p204, %p205
      %p207 = scmp.le.s32.totalorder 1, %s21
      %p208 = scmp.lt.s32.totalorder %s21, 3
      %p209 = pnand %p207, %p208
      %p210 = pneg %p209
      // Predicated region
      $region9: #{tpu_custom_call.1} parent=5 // pred_check
        _
      $region10: #{tpu_custom_call.1} parent=5 // pred_check_branch
        %212 = sbr.rel (%p209) target = $region12
      $region11: #{tpu_custom_call.1} parent=5 // pred_region
        %s213 = ssub.s32 %s21, 1
        // Predicated region
        $region13: #{tpu_custom_call.1} parent=11 // pred_check
          %p214 = pneg %p68
        $region14: #{tpu_custom_call.1} parent=11 // pred_check_branch
          %216 = sbr.rel (%p214) target = $region16
        $region15: #{tpu_custom_call.1} parent=11 // pred_region
          %218 = vsyncadd [#allocation6], 0
          %s219 = sshll.u32 %s1, 4
          %s220 = int_to_ptr.hbm [resolvable:$true] %s219
          %s221 = sshll.u32 [#allocation5], 4
          %s222 = int_to_ptr.vmem [resolvable:$true] %s221
          %227 = dma.hbm_to_vmem [thread:$0]  %s220, 2048, %s222, [#allocation6], 128, 128, 8
        $region16: #{tpu_custom_call.1} parent=11 // pred_fallthru
          _
        // Predicated region
        $region17: #{tpu_custom_call.1} parent=11 // pred_check
          %p228 = pneg %p89
        $region18: #{tpu_custom_call.1} parent=11 // pred_check_branch
          %230 = sbr.rel (%p228) target = $region20
        $region19: #{tpu_custom_call.1} parent=11 // pred_region
          %232 = vsyncadd [#allocation6], 0
          %s234 = sshll.u32 %s2, 4
          %s235 = int_to_ptr.hbm [resolvable:$true] %s234
          %s236 = sshll.u32 [#allocation7], 4
          %s237 = int_to_ptr.vmem [resolvable:$true] %s236
          %239 = dma.hbm_to_vmem [thread:$0]  %s235, 32, %s237, [#allocation6]
        $region20: #{tpu_custom_call.1} parent=11 // pred_fallthru
          _
        // Predicated region
        $region21: #{tpu_custom_call.1} parent=11 // pred_check
          %p240 = pneg %p110
        $region22: #{tpu_custom_call.1} parent=11 // pred_check_branch
          %242 = sbr.rel (%p240) target = $region24
        $region23: #{tpu_custom_call.1} parent=11 // pred_region
          %244 = vsyncadd [#allocation9], 0
          %s245 = sshll.u32 %s3, 4
          %s246 = int_to_ptr.hbm [resolvable:$true] %s245
          %s247 = sshll.u32 [#allocation8], 4
          %s248 = int_to_ptr.vmem [resolvable:$true] %s247
          %253 = dma.hbm_to_vmem [thread:$0]  %s246, 2048, %s248, [#allocation9], 64, 64, 4
        $region24: #{tpu_custom_call.1} parent=11 // pred_fallthru
          _
        // Predicated region
        $region25: #{tpu_custom_call.1} parent=11 // pred_check
          %p254 = pneg %p131
        $region26: #{tpu_custom_call.1} parent=11 // pred_check_branch
          %256 = sbr.rel (%p254) target = $region28
        $region27: #{tpu_custom_call.1} parent=11 // pred_region
          _
        $region28: #{tpu_custom_call.1} parent=11 // pred_fallthru
          _
        // Predicated region
        $region29: #{tpu_custom_call.1} parent=11 // pred_check
          %p257 = pneg %p152
        $region30: #{tpu_custom_call.1} parent=11 // pred_check_branch
          %259 = sbr.rel (%p257) target = $region32
        $region31: #{tpu_custom_call.1} parent=11 // pred_region
          _
        $region32: #{tpu_custom_call.1} parent=11 // pred_fallthru
          _
        // Predicated region
        $region33: #{tpu_custom_call.1} parent=11 // pred_check
          %p260 = pneg %p173
        $region34: #{tpu_custom_call.1} parent=11 // pred_check_branch
          %262 = sbr.rel (%p260) target = $region36
        $region35: #{tpu_custom_call.1} parent=11 // pred_region
          _
        $region36: #{tpu_custom_call.1} parent=11 // pred_fallthru
          _
      $region12: #{tpu_custom_call.1} parent=5 // pred_fallthru
        _
      %p263 = scmp.lt.s32.totalorder %s21, 2
      // Predicated region
      $region37: #{tpu_custom_call.1} parent=5 // pred_check
        %p264 = pneg %p263
      $region38: #{tpu_custom_call.1} parent=5 // pred_check_branch
        %266 = sbr.rel (%p264) target = $region40
      $region39: #{tpu_custom_call.1} parent=5 // pred_region
        // Predicated region
        $region41: #{tpu_custom_call.1} parent=39 // pred_check
          %p267 = pneg %p41
        $region42: #{tpu_custom_call.1} parent=39 // pred_check_branch
          %269 = sbr.rel (%p267) target = $region44
        $region43: #{tpu_custom_call.1} parent=39 // pred_region
          %s270 = sand.u32 %s31, 1
          %s271 = scalar_lea.sflag [#allocation3], %s270
          %s272 = sand.u32 %s31, 1
          %s273 = smul.addr %s272, 4
          %s274 = scalar_lea.vmem [#allocation2], %s273
          %276 = vsyncadd %s271, 0
          %s277 = smul.addr %s21, 4
          %s278 = scalar_lea.hbm %s0, %s277
          %s280 = sshll.u32 %s278, 4
          %s281 = int_to_ptr.hbm [resolvable:$true] %s280
          %s282 = sshll.u32 %s274, 4
          %s283 = int_to_ptr.vmem [resolvable:$true] %s282
          %285 = dma.hbm_to_vmem [thread:$0]  %s281, 64, %s283, %s271
        $region44: #{tpu_custom_call.1} parent=39 // pred_fallthru
          _
      $region40: #{tpu_custom_call.1} parent=5 // pred_fallthru
        _
      %p286 = scmp.le.s32.totalorder 1, %s21
      %p287 = scmp.lt.s32.totalorder %s21, 3
      %p288 = pnand %p286, %p287
      %p289 = pneg %p288
      // Predicated region
      $region45: #{tpu_custom_call.1} parent=5 // pred_check
        _
      $region46: #{tpu_custom_call.1} parent=5 // pred_check_branch
        %291 = sbr.rel (%p288) target = $region48
      $region47: #{tpu_custom_call.1} parent=5 // pred_region
        %s292 = ssub.s32 %s21, 1
        %s293 = sand.u32 %s34, 1
        %s294 = scalar_lea.sflag [#allocation3], %s293
        %s295 = sand.u32 %s34, 1
        %s296 = smul.addr %s295, 4
        %s297 = scalar_lea.vmem [#allocation2], %s296
        // Predicated region
        $region49: #{tpu_custom_call.1} parent=47 // pred_check
          %p298 = pneg %p47
        $region50: #{tpu_custom_call.1} parent=47 // pred_check_branch
          %300 = sbr.rel (%p298) target = $region52
        $region51: #{tpu_custom_call.1} parent=47 // pred_region
          %302 = dma.done %s294, 64
        $region52: #{tpu_custom_call.1} parent=47 // pred_fallthru
          _
        // Predicated region
        $region53: #{tpu_custom_call.1} parent=47 // pred_check
          %p303 = pneg %p68
        $region54: #{tpu_custom_call.1} parent=47 // pred_check_branch
          %305 = sbr.rel (%p303) target = $region56
        $region55: #{tpu_custom_call.1} parent=47 // pred_region
          %307 = dma.done [#allocation6], 2048
        $region56: #{tpu_custom_call.1} parent=47 // pred_fallthru
          _
        // Predicated region
        $region57: #{tpu_custom_call.1} parent=47 // pred_check
          %p308 = pneg %p89
        $region58: #{tpu_custom_call.1} parent=47 // pred_check_branch
          %310 = sbr.rel (%p308) target = $region60
        $region59: #{tpu_custom_call.1} parent=47 // pred_region
          %312 = dma.done [#allocation6], 32
        $region60: #{tpu_custom_call.1} parent=47 // pred_fallthru
          _
        // Predicated region
        $region61: #{tpu_custom_call.1} parent=47 // pred_check
          %p313 = pneg %p110
        $region62: #{tpu_custom_call.1} parent=47 // pred_check_branch
          %315 = sbr.rel (%p313) target = $region64
        $region63: #{tpu_custom_call.1} parent=47 // pred_region
          %317 = dma.done [#allocation9], 2048
        $region64: #{tpu_custom_call.1} parent=47 // pred_fallthru
          _
        %s318 = sand.u32 %s34, 1
        %s319 = scalar_lea.sflag [#allocation3], %s318
        %s320 = sand.u32 %s34, 1
        %s321 = smul.addr %s320, 4
        %s322 = scalar_lea.vmem [#allocation2], %s321
        %p323 = pneg %p47
        %p324 = pneg %p44
        %p325 = pneg %p68
        %p326 = pneg %p65
        %p327 = pneg %p89
        %p328 = pneg %p86
        %p329 = pneg %p110
        %p330 = pneg %p107
        %p331 = pneg %p131
        %p332 = pneg %p128
        %p333 = pneg %p152
        %p334 = pneg %p149
        %p335 = pneg %p173
        %p336 = pneg %p170
        %p337 = pneg %p199
        %p338 = pneg %p196
        %s339 = sand.u32 %s186, 1
        %s340 = scalar_lea.sflag [#allocation4], %s339
        %s341 = sand.u32 %s186, 1
        %s342 = smul.addr %s341, 8
        %s343 = scalar_lea.vmem [#allocation10], %s342
        %v344 = vld [vmem:[%s297] sm:$0xf]
        %v345 = vld [vmem:[#allocation5] sm:$0xff]
        %v346 = vld [vmem:[#allocation5 + $0x8] sm:$0xff]
        %v347 = vld [vmem:[#allocation5 + $0x10] sm:$0xff]
        %v348 = vld [vmem:[#allocation5 + $0x18] sm:$0xff]
        %v349 = vld [vmem:[#allocation5 + $0x20] sm:$0xff]
        %v350 = vld [vmem:[#allocation5 + $0x28] sm:$0xff]
        %v351 = vld [vmem:[#allocation5 + $0x30] sm:$0xff]
        %v352 = vld [vmem:[#allocation5 + $0x38] sm:$0xff]
        %v353 = vld [vmem:[#allocation5 + $0x40] sm:$0xff]
        %v354 = vld [vmem:[#allocation5 + $0x48] sm:$0xff]
        %v355 = vld [vmem:[#allocation5 + $0x50] sm:$0xff]
        %v356 = vld [vmem:[#allocation5 + $0x58] sm:$0xff]
        %v357 = vld [vmem:[#allocation5 + $0x60] sm:$0xff]
        %v358 = vld [vmem:[#allocation5 + $0x68] sm:$0xff]
        %v359 = vld [vmem:[#allocation5 + $0x70] sm:$0xff]
        %v360 = vld [vmem:[#allocation5 + $0x78] sm:$0xff]
        %v361 = vld [vmem:[#allocation7] sm:$0x3]
        %v363 = vperm.slane %v361, 0
        %v364 = vperm.slane %v361, 1
        %v383 = vunpack.c.l.b16 %v345
        %v384 = vunpack.c.h.b16 %v345
        %v385 = vunpack.c.l.b16 %v346
        %v386 = vunpack.c.h.b16 %v346
        %v387 = vunpack.c.l.b16 %v347
        %v388 = vunpack.c.h.b16 %v347
        %v389 = vunpack.c.l.b16 %v348
        %v390 = vunpack.c.h.b16 %v348
        %v391 = vunpack.c.l.b16 %v349
        %v392 = vunpack.c.h.b16 %v349
        %v393 = vunpack.c.l.b16 %v350
        %v394 = vunpack.c.h.b16 %v350
        %v395 = vunpack.c.l.b16 %v351
        %v396 = vunpack.c.h.b16 %v351
        %v397 = vunpack.c.l.b16 %v352
        %v398 = vunpack.c.h.b16 %v352
        %v399 = vunpack.c.l.b16 %v353
        %v400 = vunpack.c.h.b16 %v353
        %v401 = vunpack.c.l.b16 %v354
        %v402 = vunpack.c.h.b16 %v354
        %v403 = vunpack.c.l.b16 %v355
        %v404 = vunpack.c.h.b16 %v355
        %v405 = vunpack.c.l.b16 %v356
        %v406 = vunpack.c.h.b16 %v356
        %v407 = vunpack.c.l.b16 %v357
        %v408 = vunpack.c.h.b16 %v357
        %v409 = vunpack.c.l.b16 %v358
        %v410 = vunpack.c.h.b16 %v358
        %v411 = vunpack.c.l.b16 %v359
        %v412 = vunpack.c.h.b16 %v359
        %v413 = vunpack.c.l.b16 %v360
        %v414 = vunpack.c.h.b16 %v360
        %v415 = vpack.c.b16 %v385, %v383
        %v416 = vpack.c.b16 %v386, %v384
        %v417 = vpack.c.b16 %v389, %v387
        %v418 = vpack.c.b16 %v390, %v388
        %v419 = vpack.c.b16 %v393, %v391
        %v420 = vpack.c.b16 %v394, %v392
        %v421 = vpack.c.b16 %v397, %v395
        %v422 = vpack.c.b16 %v398, %v396
        %v423 = vpack.c.b16 %v401, %v399
        %v424 = vpack.c.b16 %v402, %v400
        %v425 = vpack.c.b16 %v405, %v403
        %v426 = vpack.c.b16 %v406, %v404
        %v427 = vpack.c.b16 %v409, %v407
        %v428 = vpack.c.b16 %v410, %v408
        %v429 = vpack.c.b16 %v413, %v411
        %v430 = vpack.c.b16 %v414, %v412
        %447 = vmatpush.bf16.msra.mxu0 %v429
        %448 = vmatpush.bf16.msra.mxu0 %v427
        %449 = vmatpush.bf16.msra.mxu0 %v425
        %450 = vmatpush.bf16.msra.mxu0 %v423
        %451 = vmatpush.bf16.msra.mxu0 %v421
        %452 = vmatpush.bf16.msra.mxu0 %v419
        %453 = vmatpush.bf16.msra.mxu0 %v417
        %454 = vmatpush.bf16.msra.mxu0 %v415
        %455 = vmatmul.bf16.gmra.mxu0 %v344
        %v456 = vpop.f32.mrf.mxu0
        %v457 = vadd.f32 %v363, %v456
        %v458 = vpop.f32.mrf.mxu0
        %459 = vdwg.mxu0
        %460 = vmatpush.bf16.msra.mxu0 %v430
        %461 = vmatpush.bf16.msra.mxu0 %v428
        %462 = vmatpush.bf16.msra.mxu0 %v426
        %463 = vmatpush.bf16.msra.mxu0 %v424
        %464 = vmatpush.bf16.msra.mxu0 %v422
        %465 = vmatpush.bf16.msra.mxu0 %v420
        %466 = vmatpush.bf16.msra.mxu0 %v418
        %467 = vmatpush.bf16.msra.mxu0 %v416
        %468 = vmatmul.bf16.gmra.mxu0 %v344
        %v469 = vpop.f32.mrf.mxu0
        %v470 = vadd.f32 %v364, %v469
        %v471 = vpop.f32.mrf.mxu0
        %472 = vdwg.mxu0
        %v473 = vmax.f32 %v457, 0.0
        %v474 = vmax.f32 %v470, 0.0
        %v475 = vpack.c.bf16 %v473, %v473
        %v476 = vpack.c.bf16 %v474, %v474
        %v477 = vld [vmem:[#allocation8] sm:$0xf]
        %v478 = vld [vmem:[#allocation8 + $0x4] sm:$0xf]
        %v479 = vld [vmem:[#allocation8 + $0x8] sm:$0xf]
        %v480 = vld [vmem:[#allocation8 + $0xc] sm:$0xf]
        %v481 = vld [vmem:[#allocation8 + $0x10] sm:$0xf]
        %v482 = vld [vmem:[#allocation8 + $0x14] sm:$0xf]
        %v483 = vld [vmem:[#allocation8 + $0x18] sm:$0xf]
        %v484 = vld [vmem:[#allocation8 + $0x1c] sm:$0xf]
        %v485 = vld [vmem:[#allocation8 + $0x20] sm:$0xf]
        %v486 = vld [vmem:[#allocation8 + $0x24] sm:$0xf]
        %v487 = vld [vmem:[#allocation8 + $0x28] sm:$0xf]
        %v488 = vld [vmem:[#allocation8 + $0x2c] sm:$0xf]
        %v489 = vld [vmem:[#allocation8 + $0x30] sm:$0xf]
        %v490 = vld [vmem:[#allocation8 + $0x34] sm:$0xf]
        %v491 = vld [vmem:[#allocation8 + $0x38] sm:$0xf]
        %v492 = vld [vmem:[#allocation8 + $0x3c] sm:$0xf]
        %v493 = vld [vmem:[#allocation8 + $0x40] sm:$0xf]
        %v494 = vld [vmem:[#allocation8 + $0x44] sm:$0xf]
        %v495 = vld [vmem:[#allocation8 + $0x48] sm:$0xf]
        %v496 = vld [vmem:[#allocation8 + $0x4c] sm:$0xf]
        %v497 = vld [vmem:[#allocation8 + $0x50] sm:$0xf]
        %v498 = vld [vmem:[#allocation8 + $0x54] sm:$0xf]
        %v499 = vld [vmem:[#allocation8 + $0x58] sm:$0xf]
        %v500 = vld [vmem:[#allocation8 + $0x5c] sm:$0xf]
        %v501 = vld [vmem:[#allocation8 + $0x60] sm:$0xf]
        %v502 = vld [vmem:[#allocation8 + $0x64] sm:$0xf]
        %v503 = vld [vmem:[#allocation8 + $0x68] sm:$0xf]
        %v504 = vld [vmem:[#allocation8 + $0x6c] sm:$0xf]
        %v505 = vld [vmem:[#allocation8 + $0x70] sm:$0xf]
        %v506 = vld [vmem:[#allocation8 + $0x74] sm:$0xf]
        %v507 = vld [vmem:[#allocation8 + $0x78] sm:$0xf]
        %v508 = vld [vmem:[#allocation8 + $0x7c] sm:$0xf]
        %v509 = vld [vmem:[%s4] sm:$0x1]
        %v511 = vperm.slane %v509, 0
        %v545 = vunpack.c.l.b16 %v477
        %v546 = vunpack.c.l.b16 %v478
        %v547 = vunpack.c.l.b16 %v479
        %v548 = vunpack.c.l.b16 %v480
        %v549 = vunpack.c.l.b16 %v481
        %v550 = vunpack.c.l.b16 %v482
        %v551 = vunpack.c.l.b16 %v483
        %v552 = vunpack.c.l.b16 %v484
        %v553 = vunpack.c.l.b16 %v485
        %v554 = vunpack.c.l.b16 %v486
        %v555 = vunpack.c.l.b16 %v487
        %v556 = vunpack.c.l.b16 %v488
        %v557 = vunpack.c.l.b16 %v489
        %v558 = vunpack.c.l.b16 %v490
        %v559 = vunpack.c.l.b16 %v491
        %v560 = vunpack.c.l.b16 %v492
        %v561 = vunpack.c.l.b16 %v493
        %v562 = vunpack.c.l.b16 %v494
        %v563 = vunpack.c.l.b16 %v495
        %v564 = vunpack.c.l.b16 %v496
        %v565 = vunpack.c.l.b16 %v497
        %v566 = vunpack.c.l.b16 %v498
        %v567 = vunpack.c.l.b16 %v499
        %v568 = vunpack.c.l.b16 %v500
        %v569 = vunpack.c.l.b16 %v501
        %v570 = vunpack.c.l.b16 %v502
        %v571 = vunpack.c.l.b16 %v503
        %v572 = vunpack.c.l.b16 %v504
        %v573 = vunpack.c.l.b16 %v505
        %v574 = vunpack.c.l.b16 %v506
        %v575 = vunpack.c.l.b16 %v507
        %v576 = vunpack.c.l.b16 %v508
        %v577 = vpack.c.b16 %v546, %v545
        %v578 = vpack.c.b16 %v548, %v547
        %v579 = vpack.c.b16 %v550, %v549
        %v580 = vpack.c.b16 %v552, %v551
        %v581 = vpack.c.b16 %v554, %v553
        %v582 = vpack.c.b16 %v556, %v555
        %v583 = vpack.c.b16 %v558, %v557
        %v584 = vpack.c.b16 %v560, %v559
        %v585 = vpack.c.b16 %v562, %v561
        %v586 = vpack.c.b16 %v564, %v563
        %v587 = vpack.c.b16 %v566, %v565
        %v588 = vpack.c.b16 %v568, %v567
        %v589 = vpack.c.b16 %v570, %v569
        %v590 = vpack.c.b16 %v572, %v571
        %v591 = vpack.c.b16 %v574, %v573
        %v592 = vpack.c.b16 %v576, %v575
        %609 = vmatpush.bf16.msra.mxu0 %v584
        %610 = vmatpush.bf16.msra.mxu0 %v583
        %611 = vmatpush.bf16.msra.mxu0 %v582
        %612 = vmatpush.bf16.msra.mxu0 %v581
        %613 = vmatpush.bf16.msra.mxu0 %v580
        %614 = vmatpush.bf16.msra.mxu0 %v579
        %615 = vmatpush.bf16.msra.mxu0 %v578
        %616 = vmatpush.bf16.msra.mxu0 %v577
        %617 = vmatmul.bf16.gmra.mxu0 %v475
        %v618 = vpop.f32.mrf.mxu0
        %v619 = vadd.f32 %v511, %v618
        %v620 = vpop.f32.mrf.mxu0
        %621 = vdwg.mxu0
        %622 = vmatpush.bf16.msra.mxu0 %v592
        %623 = vmatpush.bf16.msra.mxu0 %v591
        %624 = vmatpush.bf16.msra.mxu0 %v590
        %625 = vmatpush.bf16.msra.mxu0 %v589
        %626 = vmatpush.bf16.msra.mxu0 %v588
        %627 = vmatpush.bf16.msra.mxu0 %v587
        %628 = vmatpush.bf16.msra.mxu0 %v586
        %629 = vmatpush.bf16.msra.mxu0 %v585
        %630 = vmatmul.bf16.gmra.mxu0 %v476
        %v631 = vpop.f32.mrf.mxu0
        %v632 = vadd.f32 %v619, %v631
        %v633 = vpop.f32.mrf.mxu0
        %634 = vdwg.mxu0
        %635 = vadd.xlane.f32.xlu0 %v632
        %v636 = vpop.xlane.xlu0 %635
        %v637 = vrcp.pop 128.0
        %v638 = vmul.f32 128.0, %v637
        %v639 = vsub.f32 1.0, %v638
        %v640 = vmul.f32 %v637, %v639
        %v641 = vadd.f32 %v637, %v640
        %vm642 = vweird.f32 %v637
        %v643 = vsel %vm642, %v637, %v641
        %v644 = vmul.f32 %v636, %v643
        %v645 = vmul.f32 %v632, %v632
        %646 = vadd.xlane.f32.xlu0 %v645
        %v647 = vpop.xlane.xlu0 %646
        %v648 = vmul.f32 %v647, %v643
        %v649 = vmul.f32 %v644, %v644
        %v650 = vsub.f32 %v648, %v649
        %v651 = vld [vmem:[%s5] sm:$0x1]
        %v652 = vadd.f32 %v650, 1e-05
        %v653 = vrsqrt.pop %v652
        %v654 = vmul.f32 %v653, %v652
        %v655 = vmul.f32 %v654, %v653
        %v656 = vmul.f32 0.5, %v655
        %v657 = vsub.f32 1.5, %v656
        %v658 = vmul.f32 %v653, %v657
        %vm659 = vweird.f32 %v652
        %vm660 = vweird.f32 %v653
        %vm661 = vmor %vm659, %vm660
        %v662 = vsel %vm661, %v653, %v658
        %v664 = vperm.slane %v651, 0
        %v666 = vmul.f32 %v664, %v662
        %v667 = vld [vmem:[%s6] sm:$0x1]
        %v668 = vmul.f32 %v644, %v666
        %v670 = vperm.slane %v667, 0
        %v672 = vsub.f32 %v670, %v668
        %v673 = vmul.f32 %v632, %v666
        %v674 = vadd.f32 %v673, %v672
        %675 = vst [vmem:[%s343] sm:$0xff] %v674
        %s676 = sand.u32 %s186, 1
        %s677 = scalar_lea.sflag [#allocation4], %s676
        %s678 = sand.u32 %s186, 1
        %s679 = smul.addr %s678, 8
        %s680 = scalar_lea.vmem [#allocation10], %s679
        // Predicated region
        $region65: #{tpu_custom_call.1} parent=47 // pred_check
          %p681 = pneg %p196
        $region66: #{tpu_custom_call.1} parent=47 // pred_check_branch
          %683 = sbr.rel (%p681) target = $region68
        $region67: #{tpu_custom_call.1} parent=47 // pred_region
          %685 = vsyncadd %s677, 0
          %s686 = smul.addr %s26, 8
          %s687 = scalar_lea.hbm %s7, %s686
          %s689 = sshll.u32 %s680, 4
          %s690 = int_to_ptr.vmem [resolvable:$true] %s689
          %s691 = sshll.u32 %s687, 4
          %s692 = int_to_ptr.hbm [resolvable:$true] %s691
          %694 = dma.vmem_to_hbm [thread:$0]  %s690, 128, %s692, %s677
        $region68: #{tpu_custom_call.1} parent=47 // pred_fallthru
          _
      $region48: #{tpu_custom_call.1} parent=5 // pred_fallthru
        _
      %p695 = scmp.le.s32.totalorder 2, %s21
      // Predicated region
      $region69: #{tpu_custom_call.1} parent=5 // pred_check
        %p696 = pneg %p695
      $region70: #{tpu_custom_call.1} parent=5 // pred_check_branch
        %698 = sbr.rel (%p696) target = $region72
      $region71: #{tpu_custom_call.1} parent=5 // pred_region
        %s699 = ssub.s32 %s21, 2
        // Predicated region
        $region73: #{tpu_custom_call.1} parent=71 // pred_check
          %p700 = pneg %p202
        $region74: #{tpu_custom_call.1} parent=71 // pred_check_branch
          %702 = sbr.rel (%p700) target = $region76
        $region75: #{tpu_custom_call.1} parent=71 // pred_region
          %s703 = sand.u32 %s187, 1
          %s704 = scalar_lea.sflag [#allocation4], %s703
          %s705 = sand.u32 %s187, 1
          %s706 = smul.addr %s705, 8
          %s707 = scalar_lea.vmem [#allocation10], %s706
          %709 = dma.done %s704, 128
        $region76: #{tpu_custom_call.1} parent=71 // pred_fallthru
          _
      $region72: #{tpu_custom_call.1} parent=5 // pred_fallthru
        _
    $region6: #{tpu_custom_call.1} parent=1 // loop_footer
      %s25 = sadd.s32 1, %s21
    $region7: #{tpu_custom_call.1} parent=1 // loop_footer_branch
      %20 = sbr.rel target = $region3
    $region8: #{tpu_custom_call.1} parent=1 // loop_exit
      _
    %710 = vsyncpa [#allocation3], 1
    %s711 = scalar_lea.sflag [#allocation3], 1
    %712 = vsyncpa %s711, 1
    %713 = vsyncpa [#allocation6], 1
    %714 = vsyncpa [#allocation9], 1
    %715 = vsyncpa [#allocation4], 1
    %s716 = scalar_lea.sflag [#allocation4], 1
    %717 = vsyncpa %s716, 1

</llo_original>
